<compile_context>
chip_gen: v7x
topology: tpu7x:2x2x1
jax: 0.10.0
libtpu: 0.0.40
codegen_flags: <defaults>
</compile_context>

<pallas_src>
import functools

import numpy as np
import jax
import jax.numpy as jnp
from jax import lax
from jax.experimental import pallas as pl
from jax.experimental.pallas import tpu as pltpu


def _hardswish(v):
    # PyTorch nn.Hardswish: x * relu6(x + 3) / 6
    return v * jnp.clip(v + 3.0, 0.0, 6.0) * (1.0 / 6.0)


# ------------------------------ fused kernel ------------------------------- #

def _ghost_kernel(x_ref, w1_ref, b1_ref, w2_ref, b2_ref, mask_ref, out_ref, *, H, W):
    """Fused GhostConv for one batch element, lane-dense flat-spatial layout.

    x_ref   : (1, C1, HW)    VMEM input block (HW = H*W on the lane axis)
    w1_ref  : (C_, C1)       VMEM folded 1x1 conv+BN weights
    b1_ref  : (C_, 1)        VMEM folded BN bias for cv1
    w2_ref  : (25, C_, 1)    VMEM folded depthwise 5x5 taps (tap index t = ky*5 + kx)
    b2_ref  : (C_, 1)        VMEM folded BN bias for cv2
    mask_ref: (25, 1, HW)    VMEM 0/1 border masks (zero where the 5x5 window falls
                             into the conv zero-padding)
    out_ref : (1, 2*C_, HW)  VMEM output block; channels [0:C_]=y, [C_:2C_]=z
    """
    HW = H * W
    C_ = w1_ref.shape[0]

    x = x_ref[0].astype(jnp.float32)                                   # (C1, HW)

    # ---- cv1: 1x1 conv (+folded BN) on the MXU, hardswish on the VPU --------
    y = jnp.dot(w1_ref[...], x, preferred_element_type=jnp.float32)   # (C_, HW)
    y = _hardswish(y + b1_ref[...])
    out_ref[0, 0:C_, :] = y.astype(out_ref.dtype)          # first half of the concat

    # ---- cv2: depthwise 5x5 conv (pad=2) + BN + hardswish --------------------
    # Tap (dy, dx) of the zero-padded conv == y shifted by s = dy*W + dx on the flat
    # spatial axis, zeroed (via mask) wherever the window crosses the H/W borders.
    # The shifts run on the XLU (pltpu.roll); wrap-around lanes are always masked.
    acc = y * w2_ref[12]                                    # center tap, mask == 1
    for ky in range(5):
        for kx in range(5):
            dy, dx = ky - 2, kx - 2
            if dy == 0 and dx == 0:
                continue
            t = ky * 5 + kx
            s = dy * W + dx                                 # source offset, flat axis
            shifted = pltpu.roll(y, (-s) % HW, axis=1)      # shifted[p] = y[(p+s)%HW]
            acc = acc + shifted * (mask_ref[t] * w2_ref[t])
    z = _hardswish(acc + b2_ref[...])
    out_ref[0, C_:2 * C_, :] = z.astype(out_ref.dtype)      # second half of the concat


# ------------------------------- wrapper ----------------------------------- #

def ghost_conv(x_nchw, w1, b1, w2, b2):
    """GhostConv forward.  x_nchw: (N, C1, H, W) -> (N, 2*C_, H, W), NCHW in/out.

    w1: (C_, C1)  folded 1x1 conv+BN weight
    b1: (C_,)     folded BN bias
    w2: (C_, 25)  folded depthwise 5x5 conv+BN taps (row-major ky*5+kx)
    b2: (C_,)     folded BN bias
    """
    N, C1, H, W = x_nchw.shape
    C_ = w1.shape[0]
    C2 = 2 * C_
    HW = H * W

    # Flatten spatial dims onto the lane axis (trailing-dim merge: no data movement).
    x_flat = x_nchw.reshape(N, C1, HW)

    # Per-tap 0/1 border masks for the padded depthwise conv (tiny, host-side numpy).
    ii = np.arange(H)[:, None]
    jj = np.arange(W)[None, :]
    masks = np.empty((25, 1, HW), np.float32)
    for ky in range(5):
        for kx in range(5):
            dy, dx = ky - 2, kx - 2
            m = (ii + dy >= 0) & (ii + dy < H) & (jj + dx >= 0) & (jj + dx < W)
            masks[ky * 5 + kx, 0, :] = m.astype(np.float32).reshape(HW)
    masks = jnp.asarray(masks)

    w1v = w1.astype(jnp.float32)                            # (C_, C1)
    b1v = b1.astype(jnp.float32).reshape(C_, 1)             # (C_, 1)
    w2v = w2.astype(jnp.float32).T.reshape(25, C_, 1)       # (25, C_, 1)
    b2v = b2.astype(jnp.float32).reshape(C_, 1)             # (C_, 1)

    vmem = pl.BlockSpec(memory_space=pltpu.MemorySpace.VMEM)
    kernel = functools.partial(_ghost_kernel, H=H, W=W)

    out_flat = pl.pallas_call(
        kernel,
        grid=(N,),
        in_specs=[
            pl.BlockSpec((1, C1, HW), lambda n: (n, 0, 0)),
            vmem,   # w1
            vmem,   # b1
            vmem,   # w2
            vmem,   # b2
            vmem,   # masks
        ],
        out_specs=pl.BlockSpec((1, C2, HW), lambda n: (n, 0, 0)),
        out_shape=jax.ShapeDtypeStruct((N, C2, HW), jnp.float32),
        compiler_params=pltpu.CompilerParams(dimension_semantics=("parallel",)),
    )(x_flat, w1v, b1v, w2v, b2v, masks)

    return out_flat.reshape(N, C2, H, W)


# ------------------------- reference (plain JAX) ---------------------------- #

def ref_ghost_conv(x, w1_oihw, bn1, w2_oihw, bn2, c_):
    eps = 1e-5

    def conv_bn_hs(v, w, bn, groups, pad):
        g, b, m, var = bn
        o = lax.conv_general_dilated(
            v, w, window_strides=(1, 1), padding=[(pad, pad), (pad, pad)],
            dimension_numbers=("NCHW", "OIHW", "NCHW"),
            feature_group_count=groups)
        o = (o - m[None, :, None, None]) / jnp.sqrt(var[None, :, None, None] + eps)
        o = o * g[None, :, None, None] + b[None, :, None, None]
        return _hardswish(o)

    y = conv_bn_hs(x, w1_oihw, bn1, 1, 0)
    z = conv_bn_hs(y, w2_oihw, bn2, c_, 2)
    return jnp.concatenate([y, z], axis=1)


# --------------------------------- main ------------------------------------ #

if __name__ == "__main__":
    key = jax.random.PRNGKey(0)
    N, C1, H, W = 2, 4, 16, 16
    C2 = 8
    C_ = C2 // 2
    eps = 1e-5

    ks = jax.random.split(key, 12)
    x = jax.random.normal(ks[0], (N, C1, H, W), jnp.float32)

    # cv1 parameters (Conv2d(C1, C_, 1, bias=False) + BatchNorm2d(C_))
    w1_oihw = jax.random.normal(ks[1], (C_, C1, 1, 1), jnp.float32) * 0.5
    g1 = jax.random.normal(ks[2], (C_,), jnp.float32) * 0.1 + 1.0
    be1 = jax.random.normal(ks[3], (C_,), jnp.float32) * 0.1
    m1 = jax.random.normal(ks[4], (C_,), jnp.float32) * 0.1
    v1 = jax.random.uniform(ks[5], (C_,), jnp.float32, 0.5, 1.5)

    # cv2 parameters (Conv2d(C_, C_, 5, groups=C_, bias=False) + BatchNorm2d(C_))
    w2_oihw = jax.random.normal(ks[6], (C_, 1, 5, 5), jnp.float32) * 0.2
    g2 = jax.random.normal(ks[7], (C_,), jnp.float32) * 0.1 + 1.0
    be2 = jax.random.normal(ks[8], (C_,), jnp.float32) * 0.1
    m2 = jax.random.normal(ks[9], (C_,), jnp.float32) * 0.1
    v2 = jax.random.uniform(ks[10], (C_,), jnp.float32, 0.5, 1.5)

    # Fold BN into conv weights/bias for the Pallas kernel.
    s1 = g1 / jnp.sqrt(v1 + eps)                                         # (C_,)
    w1_fold = w1_oihw[:, :, 0, 0] * s1[:, None]                          # (C_, C1)
    b1_fold = be1 - m1 * s1                                              # (C_,)

    s2 = g2 / jnp.sqrt(v2 + eps)                                         # (C_,)
    w2_fold = (w2_oihw[:, 0, :, :] * s2[:, None, None]).reshape(C_, 25)  # (C_, 25)
    b2_fold = be2 - m2 * s2                                              # (C_,)

    out = ghost_conv(x, w1_fold, b1_fold, w2_fold, b2_fold)
    out = jax.block_until_ready(out)

    ref = ref_ghost_conv(x, w1_oihw, (g1, be1, m1, v1), w2_oihw, (g2, be2, m2, v2), C_)
    assert out.shape == (N, C2, H, W), out.shape
    assert jnp.allclose(out, ref, rtol=1e-4, atol=1e-4), float(jnp.max(jnp.abs(out - ref)))

    print("KERNEL_OK")
</pallas_src>

<mosaic_0001>
module attributes {stable_mosaic.version = 11 : i64} {
  func.func @_ghost_kernel(%arg0: i32, %arg1: memref<1x4x256xf32, #tpu.memory_space<vmem>>, %arg2: memref<4x4xf32, #tpu.memory_space<vmem>>, %arg3: memref<4x1xf32, #tpu.memory_space<vmem>>, %arg4: memref<25x4x1xf32, #tpu.memory_space<vmem>>, %arg5: memref<4x1xf32, #tpu.memory_space<vmem>>, %arg6: memref<25x1x256xf32, #tpu.memory_space<vmem>>, %arg7: memref<1x8x256xf32, #tpu.memory_space<vmem>>) attributes {dimension_semantics = [#tpu.dimension_semantics<parallel>], iteration_bounds = array<i64: 2>, scalar_prefetch = 0 : i64, scratch_operands = 0 : i64, tpu.core_type = #tpu.core_type<tc>, window_params = [{transform_indices = @transform_0, window_bounds = array<i64: 1, 4, 256>}, {pipeline_mode = #tpu.pipeline_mode<synchronous>, transform_indices = @transform_1, window_bounds = array<i64: 4, 4>}, {pipeline_mode = #tpu.pipeline_mode<synchronous>, transform_indices = @transform_2, window_bounds = array<i64: 4, 1>}, {pipeline_mode = #tpu.pipeline_mode<synchronous>, transform_indices = @transform_3, window_bounds = array<i64: 25, 4, 1>}, {pipeline_mode = #tpu.pipeline_mode<synchronous>, transform_indices = @transform_4, window_bounds = array<i64: 4, 1>}, {pipeline_mode = #tpu.pipeline_mode<synchronous>, transform_indices = @transform_5, window_bounds = array<i64: 25, 1, 256>}, {transform_indices = @transform_6, window_bounds = array<i64: 1, 8, 256>}]} {
    %c0 = arith.constant 0 : index
    %c0_0 = arith.constant 0 : index
    %c0_1 = arith.constant 0 : index
    %0 = vector.load %arg1[%c0, %c0_0, %c0_1] : memref<1x4x256xf32, #tpu.memory_space<vmem>>, vector<1x4x256xf32>
    %1 = vector.shape_cast %0 : vector<1x4x256xf32> to vector<4x256xf32>
    %c0_2 = arith.constant 0 : index
    %c0_3 = arith.constant 0 : index
    %2 = vector.load %arg2[%c0_2, %c0_3] : memref<4x4xf32, #tpu.memory_space<vmem>>, vector<4x4xf32>
    %cst = arith.constant dense<0.000000e+00> : vector<4x256xf32>
    %3 = tpu.matmul %2, %1, %cst {dimension_numbers = #tpu.dot_dimension_numbers<[1], [0], [0], [1], [0, 0, 1, 1], [], []>} : vector<4x4xf32>, vector<4x256xf32>, vector<4x256xf32> -> vector<4x256xf32>
    %c0_4 = arith.constant 0 : index
    %c0_5 = arith.constant 0 : index
    %4 = vector.load %arg3[%c0_4, %c0_5] : memref<4x1xf32, #tpu.memory_space<vmem>>, vector<4x1xf32>
    %5 = vector.broadcast %4 : vector<4x1xf32> to vector<4x256xf32>
    %6 = arith.addf %3, %5 : vector<4x256xf32>
    %cst_6 = arith.constant 3.000000e+00 : f32
    %7 = vector.broadcast %cst_6 : f32 to vector<4x256xf32>
    %8 = arith.addf %6, %7 : vector<4x256xf32>
    %cst_7 = arith.constant 0.000000e+00 : f32
    %cst_8 = arith.constant 6.000000e+00 : f32
    %9 = vector.broadcast %cst_7 : f32 to vector<4x256xf32>
    %10 = arith.maximumf %9, %8 : vector<4x256xf32>
    %11 = vector.broadcast %cst_8 : f32 to vector<4x256xf32>
    %12 = arith.minimumf %11, %10 : vector<4x256xf32>
    %13 = arith.mulf %6, %12 : vector<4x256xf32>
    %cst_9 = arith.constant 0.166666672 : f32
    %14 = vector.broadcast %cst_9 : f32 to vector<4x256xf32>
    %15 = arith.mulf %13, %14 : vector<4x256xf32>
    %c0_10 = arith.constant 0 : index
    %c0_11 = arith.constant 0 : index
    %c0_12 = arith.constant 0 : index
    %16 = vector.load %arg7[%c0_10, %c0_11, %c0_12] : memref<1x8x256xf32, #tpu.memory_space<vmem>>, vector<1x4x256xf32>
    %17 = vector.shape_cast %16 : vector<1x4x256xf32> to vector<4x256xf32>
    %18 = vector.shape_cast %15 : vector<4x256xf32> to vector<1x4x256xf32>
    tpu.vector_store %arg7[%c0_10, %c0_11, %c0_12], %18 {strides = array<i32>} : memref<1x8x256xf32, #tpu.memory_space<vmem>>, vector<1x4x256xf32>,
    %c12 = arith.constant 12 : index
    %c0_13 = arith.constant 0 : index
    %c0_14 = arith.constant 0 : index
    %19 = vector.load %arg4[%c12, %c0_13, %c0_14] : memref<25x4x1xf32, #tpu.memory_space<vmem>>, vector<1x4x1xf32>
    %20 = vector.shape_cast %19 : vector<1x4x1xf32> to vector<4x1xf32>
    %21 = vector.broadcast %20 : vector<4x1xf32> to vector<4x256xf32>
    %22 = arith.mulf %15, %21 : vector<4x256xf32>
    %c34_i32 = arith.constant 34 : i32
    %23 = tpu.dynamic_rotate %15 by %c34_i32 dim 1 : vector<4x256xf32>, i32 -> vector<4x256xf32>
    %c0_15 = arith.constant 0 : index
    %c0_16 = arith.constant 0 : index
    %c0_17 = arith.constant 0 : index
    %24 = vector.load %arg6[%c0_15, %c0_16, %c0_17] : memref<25x1x256xf32, #tpu.memory_space<vmem>>, vector<1x1x256xf32>
    %25 = vector.shape_cast %24 : vector<1x1x256xf32> to vector<1x256xf32>
    %c0_18 = arith.constant 0 : index
    %c0_19 = arith.constant 0 : index
    %c0_20 = arith.constant 0 : index
    %26 = vector.load %arg4[%c0_18, %c0_19, %c0_20] : memref<25x4x1xf32, #tpu.memory_space<vmem>>, vector<1x4x1xf32>
    %27 = vector.shape_cast %26 : vector<1x4x1xf32> to vector<4x1xf32>
    %28 = vector.broadcast %25 : vector<1x256xf32> to vector<4x256xf32>
    %29 = vector.broadcast %27 : vector<4x1xf32> to vector<4x256xf32>
    %30 = arith.mulf %28, %29 : vector<4x256xf32>
    %31 = arith.mulf %23, %30 : vector<4x256xf32>
    %32 = arith.addf %22, %31 : vector<4x256xf32>
    %c33_i32 = arith.constant 33 : i32
    %33 = tpu.dynamic_rotate %15 by %c33_i32 dim 1 : vector<4x256xf32>, i32 -> vector<4x256xf32>
    %c1 = arith.constant 1 : index
    %c0_21 = arith.constant 0 : index
    %c0_22 = arith.constant 0 : index
    %34 = vector.load %arg6[%c1, %c0_21, %c0_22] : memref<25x1x256xf32, #tpu.memory_space<vmem>>, vector<1x1x256xf32>
    %35 = vector.shape_cast %34 : vector<1x1x256xf32> to vector<1x256xf32>
    %c1_23 = arith.constant 1 : index
    %c0_24 = arith.constant 0 : index
    %c0_25 = arith.constant 0 : index
    %36 = vector.load %arg4[%c1_23, %c0_24, %c0_25] : memref<25x4x1xf32, #tpu.memory_space<vmem>>, vector<1x4x1xf32>
    %37 = vector.shape_cast %36 : vector<1x4x1xf32> to vector<4x1xf32>
    %38 = vector.broadcast %35 : vector<1x256xf32> to vector<4x256xf32>
    %39 = vector.broadcast %37 : vector<4x1xf32> to vector<4x256xf32>
    %40 = arith.mulf %38, %39 : vector<4x256xf32>
    %41 = arith.mulf %33, %40 : vector<4x256xf32>
    %42 = arith.addf %32, %41 : vector<4x256xf32>
    %c32_i32 = arith.constant 32 : i32
    %43 = tpu.dynamic_rotate %15 by %c32_i32 dim 1 : vector<4x256xf32>, i32 -> vector<4x256xf32>
    %c2 = arith.constant 2 : index
    %c0_26 = arith.constant 0 : index
    %c0_27 = arith.constant 0 : index
    %44 = vector.load %arg6[%c2, %c0_26, %c0_27] : memref<25x1x256xf32, #tpu.memory_space<vmem>>, vector<1x1x256xf32>
    %45 = vector.shape_cast %44 : vector<1x1x256xf32> to vector<1x256xf32>
    %c2_28 = arith.constant 2 : index
    %c0_29 = arith.constant 0 : index
    %c0_30 = arith.constant 0 : index
    %46 = vector.load %arg4[%c2_28, %c0_29, %c0_30] : memref<25x4x1xf32, #tpu.memory_space<vmem>>, vector<1x4x1xf32>
    %47 = vector.shape_cast %46 : vector<1x4x1xf32> to vector<4x1xf32>
    %48 = vector.broadcast %45 : vector<1x256xf32> to vector<4x256xf32>
    %49 = vector.broadcast %47 : vector<4x1xf32> to vector<4x256xf32>
    %50 = arith.mulf %48, %49 : vector<4x256xf32>
    %51 = arith.mulf %43, %50 : vector<4x256xf32>
    %52 = arith.addf %42, %51 : vector<4x256xf32>
    %c31_i32 = arith.constant 31 : i32
    %53 = tpu.dynamic_rotate %15 by %c31_i32 dim 1 : vector<4x256xf32>, i32 -> vector<4x256xf32>
    %c3 = arith.constant 3 : index
    %c0_31 = arith.constant 0 : index
    %c0_32 = arith.constant 0 : index
    %54 = vector.load %arg6[%c3, %c0_31, %c0_32] : memref<25x1x256xf32, #tpu.memory_space<vmem>>, vector<1x1x256xf32>
    %55 = vector.shape_cast %54 : vector<1x1x256xf32> to vector<1x256xf32>
    %c3_33 = arith.constant 3 : index
    %c0_34 = arith.constant 0 : index
    %c0_35 = arith.constant 0 : index
    %56 = vector.load %arg4[%c3_33, %c0_34, %c0_35] : memref<25x4x1xf32, #tpu.memory_space<vmem>>, vector<1x4x1xf32>
    %57 = vector.shape_cast %56 : vector<1x4x1xf32> to vector<4x1xf32>
    %58 = vector.broadcast %55 : vector<1x256xf32> to vector<4x256xf32>
    %59 = vector.broadcast %57 : vector<4x1xf32> to vector<4x256xf32>
    %60 = arith.mulf %58, %59 : vector<4x256xf32>
    %61 = arith.mulf %53, %60 : vector<4x256xf32>
    %62 = arith.addf %52, %61 : vector<4x256xf32>
    %c30_i32 = arith.constant 30 : i32
    %63 = tpu.dynamic_rotate %15 by %c30_i32 dim 1 : vector<4x256xf32>, i32 -> vector<4x256xf32>
    %c4 = arith.constant 4 : index
    %c0_36 = arith.constant 0 : index
    %c0_37 = arith.constant 0 : index
    %64 = vector.load %arg6[%c4, %c0_36, %c0_37] : memref<25x1x256xf32, #tpu.memory_space<vmem>>, vector<1x1x256xf32>
    %65 = vector.shape_cast %64 : vector<1x1x256xf32> to vector<1x256xf32>
    %c4_38 = arith.constant 4 : index
    %c0_39 = arith.constant 0 : index
    %c0_40 = arith.constant 0 : index
    %66 = vector.load %arg4[%c4_38, %c0_39, %c0_40] : memref<25x4x1xf32, #tpu.memory_space<vmem>>, vector<1x4x1xf32>
    %67 = vector.shape_cast %66 : vector<1x4x1xf32> to vector<4x1xf32>
    %68 = vector.broadcast %65 : vector<1x256xf32> to vector<4x256xf32>
    %69 = vector.broadcast %67 : vector<4x1xf32> to vector<4x256xf32>
    %70 = arith.mulf %68, %69 : vector<4x256xf32>
    %71 = arith.mulf %63, %70 : vector<4x256xf32>
    %72 = arith.addf %62, %71 : vector<4x256xf32>
    %c18_i32 = arith.constant 18 : i32
    %73 = tpu.dynamic_rotate %15 by %c18_i32 dim 1 : vector<4x256xf32>, i32 -> vector<4x256xf32>
    %c5 = arith.constant 5 : index
    %c0_41 = arith.constant 0 : index
    %c0_42 = arith.constant 0 : index
    %74 = vector.load %arg6[%c5, %c0_41, %c0_42] : memref<25x1x256xf32, #tpu.memory_space<vmem>>, vector<1x1x256xf32>
    %75 = vector.shape_cast %74 : vector<1x1x256xf32> to vector<1x256xf32>
    %c5_43 = arith.constant 5 : index
    %c0_44 = arith.constant 0 : index
    %c0_45 = arith.constant 0 : index
    %76 = vector.load %arg4[%c5_43, %c0_44, %c0_45] : memref<25x4x1xf32, #tpu.memory_space<vmem>>, vector<1x4x1xf32>
    %77 = vector.shape_cast %76 : vector<1x4x1xf32> to vector<4x1xf32>
    %78 = vector.broadcast %75 : vector<1x256xf32> to vector<4x256xf32>
    %79 = vector.broadcast %77 : vector<4x1xf32> to vector<4x256xf32>
    %80 = arith.mulf %78, %79 : vector<4x256xf32>
    %81 = arith.mulf %73, %80 : vector<4x256xf32>
    %82 = arith.addf %72, %81 : vector<4x256xf32>
    %c17_i32 = arith.constant 17 : i32
    %83 = tpu.dynamic_rotate %15 by %c17_i32 dim 1 : vector<4x256xf32>, i32 -> vector<4x256xf32>
    %c6 = arith.constant 6 : index
    %c0_46 = arith.constant 0 : index
    %c0_47 = arith.constant 0 : index
    %84 = vector.load %arg6[%c6, %c0_46, %c0_47] : memref<25x1x256xf32, #tpu.memory_space<vmem>>, vector<1x1x256xf32>
    %85 = vector.shape_cast %84 : vector<1x1x256xf32> to vector<1x256xf32>
    %c6_48 = arith.constant 6 : index
    %c0_49 = arith.constant 0 : index
    %c0_50 = arith.constant 0 : index
    %86 = vector.load %arg4[%c6_48, %c0_49, %c0_50] : memref<25x4x1xf32, #tpu.memory_space<vmem>>, vector<1x4x1xf32>
    %87 = vector.shape_cast %86 : vector<1x4x1xf32> to vector<4x1xf32>
    %88 = vector.broadcast %85 : vector<1x256xf32> to vector<4x256xf32>
    %89 = vector.broadcast %87 : vector<4x1xf32> to vector<4x256xf32>
    %90 = arith.mulf %88, %89 : vector<4x256xf32>
    %91 = arith.mulf %83, %90 : vector<4x256xf32>
    %92 = arith.addf %82, %91 : vector<4x256xf32>
    %c16_i32 = arith.constant 16 : i32
    %93 = tpu.dynamic_rotate %15 by %c16_i32 dim 1 : vector<4x256xf32>, i32 -> vector<4x256xf32>
    %c7 = arith.constant 7 : index
    %c0_51 = arith.constant 0 : index
    %c0_52 = arith.constant 0 : index
    %94 = vector.load %arg6[%c7, %c0_51, %c0_52] : memref<25x1x256xf32, #tpu.memory_space<vmem>>, vector<1x1x256xf32>
    %95 = vector.shape_cast %94 : vector<1x1x256xf32> to vector<1x256xf32>
    %c7_53 = arith.constant 7 : index
    %c0_54 = arith.constant 0 : index
    %c0_55 = arith.constant 0 : index
    %96 = vector.load %arg4[%c7_53, %c0_54, %c0_55] : memref<25x4x1xf32, #tpu.memory_space<vmem>>, vector<1x4x1xf32>
    %97 = vector.shape_cast %96 : vector<1x4x1xf32> to vector<4x1xf32>
    %98 = vector.broadcast %95 : vector<1x256xf32> to vector<4x256xf32>
    %99 = vector.broadcast %97 : vector<4x1xf32> to vector<4x256xf32>
    %100 = arith.mulf %98, %99 : vector<4x256xf32>
    %101 = arith.mulf %93, %100 : vector<4x256xf32>
    %102 = arith.addf %92, %101 : vector<4x256xf32>
    %c15_i32 = arith.constant 15 : i32
    %103 = tpu.dynamic_rotate %15 by %c15_i32 dim 1 : vector<4x256xf32>, i32 -> vector<4x256xf32>
    %c8 = arith.constant 8 : index
    %c0_56 = arith.constant 0 : index
    %c0_57 = arith.constant 0 : index
    %104 = vector.load %arg6[%c8, %c0_56, %c0_57] : memref<25x1x256xf32, #tpu.memory_space<vmem>>, vector<1x1x256xf32>
    %105 = vector.shape_cast %104 : vector<1x1x256xf32> to vector<1x256xf32>
    %c8_58 = arith.constant 8 : index
    %c0_59 = arith.constant 0 : index
    %c0_60 = arith.constant 0 : index
    %106 = vector.load %arg4[%c8_58, %c0_59, %c0_60] : memref<25x4x1xf32, #tpu.memory_space<vmem>>, vector<1x4x1xf32>
    %107 = vector.shape_cast %106 : vector<1x4x1xf32> to vector<4x1xf32>
    %108 = vector.broadcast %105 : vector<1x256xf32> to vector<4x256xf32>
    %109 = vector.broadcast %107 : vector<4x1xf32> to vector<4x256xf32>
    %110 = arith.mulf %108, %109 : vector<4x256xf32>
    %111 = arith.mulf %103, %110 : vector<4x256xf32>
    %112 = arith.addf %102, %111 : vector<4x256xf32>
    %c14_i32 = arith.constant 14 : i32
    %113 = tpu.dynamic_rotate %15 by %c14_i32 dim 1 : vector<4x256xf32>, i32 -> vector<4x256xf32>
    %c9 = arith.constant 9 : index
    %c0_61 = arith.constant 0 : index
    %c0_62 = arith.constant 0 : index
    %114 = vector.load %arg6[%c9, %c0_61, %c0_62] : memref<25x1x256xf32, #tpu.memory_space<vmem>>, vector<1x1x256xf32>
    %115 = vector.shape_cast %114 : vector<1x1x256xf32> to vector<1x256xf32>
    %c9_63 = arith.constant 9 : index
    %c0_64 = arith.constant 0 : index
    %c0_65 = arith.constant 0 : index
    %116 = vector.load %arg4[%c9_63, %c0_64, %c0_65] : memref<25x4x1xf32, #tpu.memory_space<vmem>>, vector<1x4x1xf32>
    %117 = vector.shape_cast %116 : vector<1x4x1xf32> to vector<4x1xf32>
    %118 = vector.broadcast %115 : vector<1x256xf32> to vector<4x256xf32>
    %119 = vector.broadcast %117 : vector<4x1xf32> to vector<4x256xf32>
    %120 = arith.mulf %118, %119 : vector<4x256xf32>
    %121 = arith.mulf %113, %120 : vector<4x256xf32>
    %122 = arith.addf %112, %121 : vector<4x256xf32>
    %c2_i32 = arith.constant 2 : i32
    %123 = tpu.dynamic_rotate %15 by %c2_i32 dim 1 : vector<4x256xf32>, i32 -> vector<4x256xf32>
    %c10 = arith.constant 10 : index
    %c0_66 = arith.constant 0 : index
    %c0_67 = arith.constant 0 : index
    %124 = vector.load %arg6[%c10, %c0_66, %c0_67] : memref<25x1x256xf32, #tpu.memory_space<vmem>>, vector<1x1x256xf32>
    %125 = vector.shape_cast %124 : vector<1x1x256xf32> to vector<1x256xf32>
    %c10_68 = arith.constant 10 : index
    %c0_69 = arith.constant 0 : index
    %c0_70 = arith.constant 0 : index
    %126 = vector.load %arg4[%c10_68, %c0_69, %c0_70] : memref<25x4x1xf32, #tpu.memory_space<vmem>>, vector<1x4x1xf32>
    %127 = vector.shape_cast %126 : vector<1x4x1xf32> to vector<4x1xf32>
    %128 = vector.broadcast %125 : vector<1x256xf32> to vector<4x256xf32>
    %129 = vector.broadcast %127 : vector<4x1xf32> to vector<4x256xf32>
    %130 = arith.mulf %128, %129 : vector<4x256xf32>
    %131 = arith.mulf %123, %130 : vector<4x256xf32>
    %132 = arith.addf %122, %131 : vector<4x256xf32>
    %c1_i32 = arith.constant 1 : i32
    %133 = tpu.dynamic_rotate %15 by %c1_i32 dim 1 : vector<4x256xf32>, i32 -> vector<4x256xf32>
    %c11 = arith.constant 11 : index
    %c0_71 = arith.constant 0 : index
    %c0_72 = arith.constant 0 : index
    %134 = vector.load %arg6[%c11, %c0_71, %c0_72] : memref<25x1x256xf32, #tpu.memory_space<vmem>>, vector<1x1x256xf32>
    %135 = vector.shape_cast %134 : vector<1x1x256xf32> to vector<1x256xf32>
    %c11_73 = arith.constant 11 : index
    %c0_74 = arith.constant 0 : index
    %c0_75 = arith.constant 0 : index
    %136 = vector.load %arg4[%c11_73, %c0_74, %c0_75] : memref<25x4x1xf32, #tpu.memory_space<vmem>>, vector<1x4x1xf32>
    %137 = vector.shape_cast %136 : vector<1x4x1xf32> to vector<4x1xf32>
    %138 = vector.broadcast %135 : vector<1x256xf32> to vector<4x256xf32>
    %139 = vector.broadcast %137 : vector<4x1xf32> to vector<4x256xf32>
    %140 = arith.mulf %138, %139 : vector<4x256xf32>
    %141 = arith.mulf %133, %140 : vector<4x256xf32>
    %142 = arith.addf %132, %141 : vector<4x256xf32>
    %c255_i32 = arith.constant 255 : i32
    %143 = tpu.dynamic_rotate %15 by %c255_i32 dim 1 : vector<4x256xf32>, i32 -> vector<4x256xf32>
    %c13 = arith.constant 13 : index
    %c0_76 = arith.constant 0 : index
    %c0_77 = arith.constant 0 : index
    %144 = vector.load %arg6[%c13, %c0_76, %c0_77] : memref<25x1x256xf32, #tpu.memory_space<vmem>>, vector<1x1x256xf32>
    %145 = vector.shape_cast %144 : vector<1x1x256xf32> to vector<1x256xf32>
    %c13_78 = arith.constant 13 : index
    %c0_79 = arith.constant 0 : index
    %c0_80 = arith.constant 0 : index
    %146 = vector.load %arg4[%c13_78, %c0_79, %c0_80] : memref<25x4x1xf32, #tpu.memory_space<vmem>>, vector<1x4x1xf32>
    %147 = vector.shape_cast %146 : vector<1x4x1xf32> to vector<4x1xf32>
    %148 = vector.broadcast %145 : vector<1x256xf32> to vector<4x256xf32>
    %149 = vector.broadcast %147 : vector<4x1xf32> to vector<4x256xf32>
    %150 = arith.mulf %148, %149 : vector<4x256xf32>
    %151 = arith.mulf %143, %150 : vector<4x256xf32>
    %152 = arith.addf %142, %151 : vector<4x256xf32>
    %c254_i32 = arith.constant 254 : i32
    %153 = tpu.dynamic_rotate %15 by %c254_i32 dim 1 : vector<4x256xf32>, i32 -> vector<4x256xf32>
    %c14 = arith.constant 14 : index
    %c0_81 = arith.constant 0 : index
    %c0_82 = arith.constant 0 : index
    %154 = vector.load %arg6[%c14, %c0_81, %c0_82] : memref<25x1x256xf32, #tpu.memory_space<vmem>>, vector<1x1x256xf32>
    %155 = vector.shape_cast %154 : vector<1x1x256xf32> to vector<1x256xf32>
    %c14_83 = arith.constant 14 : index
    %c0_84 = arith.constant 0 : index
    %c0_85 = arith.constant 0 : index
    %156 = vector.load %arg4[%c14_83, %c0_84, %c0_85] : memref<25x4x1xf32, #tpu.memory_space<vmem>>, vector<1x4x1xf32>
    %157 = vector.shape_cast %156 : vector<1x4x1xf32> to vector<4x1xf32>
    %158 = vector.broadcast %155 : vector<1x256xf32> to vector<4x256xf32>
    %159 = vector.broadcast %157 : vector<4x1xf32> to vector<4x256xf32>
    %160 = arith.mulf %158, %159 : vector<4x256xf32>
    %161 = arith.mulf %153, %160 : vector<4x256xf32>
    %162 = arith.addf %152, %161 : vector<4x256xf32>
    %c242_i32 = arith.constant 242 : i32
    %163 = tpu.dynamic_rotate %15 by %c242_i32 dim 1 : vector<4x256xf32>, i32 -> vector<4x256xf32>
    %c15 = arith.constant 15 : index
    %c0_86 = arith.constant 0 : index
    %c0_87 = arith.constant 0 : index
    %164 = vector.load %arg6[%c15, %c0_86, %c0_87] : memref<25x1x256xf32, #tpu.memory_space<vmem>>, vector<1x1x256xf32>
    %165 = vector.shape_cast %164 : vector<1x1x256xf32> to vector<1x256xf32>
    %c15_88 = arith.constant 15 : index
    %c0_89 = arith.constant 0 : index
    %c0_90 = arith.constant 0 : index
    %166 = vector.load %arg4[%c15_88, %c0_89, %c0_90] : memref<25x4x1xf32, #tpu.memory_space<vmem>>, vector<1x4x1xf32>
    %167 = vector.shape_cast %166 : vector<1x4x1xf32> to vector<4x1xf32>
    %168 = vector.broadcast %165 : vector<1x256xf32> to vector<4x256xf32>
    %169 = vector.broadcast %167 : vector<4x1xf32> to vector<4x256xf32>
    %170 = arith.mulf %168, %169 : vector<4x256xf32>
    %171 = arith.mulf %163, %170 : vector<4x256xf32>
    %172 = arith.addf %162, %171 : vector<4x256xf32>
    %c241_i32 = arith.constant 241 : i32
    %173 = tpu.dynamic_rotate %15 by %c241_i32 dim 1 : vector<4x256xf32>, i32 -> vector<4x256xf32>
    %c16 = arith.constant 16 : index
    %c0_91 = arith.constant 0 : index
    %c0_92 = arith.constant 0 : index
    %174 = vector.load %arg6[%c16, %c0_91, %c0_92] : memref<25x1x256xf32, #tpu.memory_space<vmem>>, vector<1x1x256xf32>
    %175 = vector.shape_cast %174 : vector<1x1x256xf32> to vector<1x256xf32>
    %c16_93 = arith.constant 16 : index
    %c0_94 = arith.constant 0 : index
    %c0_95 = arith.constant 0 : index
    %176 = vector.load %arg4[%c16_93, %c0_94, %c0_95] : memref<25x4x1xf32, #tpu.memory_space<vmem>>, vector<1x4x1xf32>
    %177 = vector.shape_cast %176 : vector<1x4x1xf32> to vector<4x1xf32>
    %178 = vector.broadcast %175 : vector<1x256xf32> to vector<4x256xf32>
    %179 = vector.broadcast %177 : vector<4x1xf32> to vector<4x256xf32>
    %180 = arith.mulf %178, %179 : vector<4x256xf32>
    %181 = arith.mulf %173, %180 : vector<4x256xf32>
    %182 = arith.addf %172, %181 : vector<4x256xf32>
    %c240_i32 = arith.constant 240 : i32
    %183 = tpu.dynamic_rotate %15 by %c240_i32 dim 1 : vector<4x256xf32>, i32 -> vector<4x256xf32>
    %c17 = arith.constant 17 : index
    %c0_96 = arith.constant 0 : index
    %c0_97 = arith.constant 0 : index
    %184 = vector.load %arg6[%c17, %c0_96, %c0_97] : memref<25x1x256xf32, #tpu.memory_space<vmem>>, vector<1x1x256xf32>
    %185 = vector.shape_cast %184 : vector<1x1x256xf32> to vector<1x256xf32>
    %c17_98 = arith.constant 17 : index
    %c0_99 = arith.constant 0 : index
    %c0_100 = arith.constant 0 : index
    %186 = vector.load %arg4[%c17_98, %c0_99, %c0_100] : memref<25x4x1xf32, #tpu.memory_space<vmem>>, vector<1x4x1xf32>
    %187 = vector.shape_cast %186 : vector<1x4x1xf32> to vector<4x1xf32>
    %188 = vector.broadcast %185 : vector<1x256xf32> to vector<4x256xf32>
    %189 = vector.broadcast %187 : vector<4x1xf32> to vector<4x256xf32>
    %190 = arith.mulf %188, %189 : vector<4x256xf32>
    %191 = arith.mulf %183, %190 : vector<4x256xf32>
    %192 = arith.addf %182, %191 : vector<4x256xf32>
    %c239_i32 = arith.constant 239 : i32
    %193 = tpu.dynamic_rotate %15 by %c239_i32 dim 1 : vector<4x256xf32>, i32 -> vector<4x256xf32>
    %c18 = arith.constant 18 : index
    %c0_101 = arith.constant 0 : index
    %c0_102 = arith.constant 0 : index
    %194 = vector.load %arg6[%c18, %c0_101, %c0_102] : memref<25x1x256xf32, #tpu.memory_space<vmem>>, vector<1x1x256xf32>
    %195 = vector.shape_cast %194 : vector<1x1x256xf32> to vector<1x256xf32>
    %c18_103 = arith.constant 18 : index
    %c0_104 = arith.constant 0 : index
    %c0_105 = arith.constant 0 : index
    %196 = vector.load %arg4[%c18_103, %c0_104, %c0_105] : memref<25x4x1xf32, #tpu.memory_space<vmem>>, vector<1x4x1xf32>
    %197 = vector.shape_cast %196 : vector<1x4x1xf32> to vector<4x1xf32>
    %198 = vector.broadcast %195 : vector<1x256xf32> to vector<4x256xf32>
    %199 = vector.broadcast %197 : vector<4x1xf32> to vector<4x256xf32>
    %200 = arith.mulf %198, %199 : vector<4x256xf32>
    %201 = arith.mulf %193, %200 : vector<4x256xf32>
    %202 = arith.addf %192, %201 : vector<4x256xf32>
    %c238_i32 = arith.constant 238 : i32
    %203 = tpu.dynamic_rotate %15 by %c238_i32 dim 1 : vector<4x256xf32>, i32 -> vector<4x256xf32>
    %c19 = arith.constant 19 : index
    %c0_106 = arith.constant 0 : index
    %c0_107 = arith.constant 0 : index
    %204 = vector.load %arg6[%c19, %c0_106, %c0_107] : memref<25x1x256xf32, #tpu.memory_space<vmem>>, vector<1x1x256xf32>
    %205 = vector.shape_cast %204 : vector<1x1x256xf32> to vector<1x256xf32>
    %c19_108 = arith.constant 19 : index
    %c0_109 = arith.constant 0 : index
    %c0_110 = arith.constant 0 : index
    %206 = vector.load %arg4[%c19_108, %c0_109, %c0_110] : memref<25x4x1xf32, #tpu.memory_space<vmem>>, vector<1x4x1xf32>
    %207 = vector.shape_cast %206 : vector<1x4x1xf32> to vector<4x1xf32>
    %208 = vector.broadcast %205 : vector<1x256xf32> to vector<4x256xf32>
    %209 = vector.broadcast %207 : vector<4x1xf32> to vector<4x256xf32>
    %210 = arith.mulf %208, %209 : vector<4x256xf32>
    %211 = arith.mulf %203, %210 : vector<4x256xf32>
    %212 = arith.addf %202, %211 : vector<4x256xf32>
    %c226_i32 = arith.constant 226 : i32
    %213 = tpu.dynamic_rotate %15 by %c226_i32 dim 1 : vector<4x256xf32>, i32 -> vector<4x256xf32>
    %c20 = arith.constant 20 : index
    %c0_111 = arith.constant 0 : index
    %c0_112 = arith.constant 0 : index
    %214 = vector.load %arg6[%c20, %c0_111, %c0_112] : memref<25x1x256xf32, #tpu.memory_space<vmem>>, vector<1x1x256xf32>
    %215 = vector.shape_cast %214 : vector<1x1x256xf32> to vector<1x256xf32>
    %c20_113 = arith.constant 20 : index
    %c0_114 = arith.constant 0 : index
    %c0_115 = arith.constant 0 : index
    %216 = vector.load %arg4[%c20_113, %c0_114, %c0_115] : memref<25x4x1xf32, #tpu.memory_space<vmem>>, vector<1x4x1xf32>
    %217 = vector.shape_cast %216 : vector<1x4x1xf32> to vector<4x1xf32>
    %218 = vector.broadcast %215 : vector<1x256xf32> to vector<4x256xf32>
    %219 = vector.broadcast %217 : vector<4x1xf32> to vector<4x256xf32>
    %220 = arith.mulf %218, %219 : vector<4x256xf32>
    %221 = arith.mulf %213, %220 : vector<4x256xf32>
    %222 = arith.addf %212, %221 : vector<4x256xf32>
    %c225_i32 = arith.constant 225 : i32
    %223 = tpu.dynamic_rotate %15 by %c225_i32 dim 1 : vector<4x256xf32>, i32 -> vector<4x256xf32>
    %c21 = arith.constant 21 : index
    %c0_116 = arith.constant 0 : index
    %c0_117 = arith.constant 0 : index
    %224 = vector.load %arg6[%c21, %c0_116, %c0_117] : memref<25x1x256xf32, #tpu.memory_space<vmem>>, vector<1x1x256xf32>
    %225 = vector.shape_cast %224 : vector<1x1x256xf32> to vector<1x256xf32>
    %c21_118 = arith.constant 21 : index
    %c0_119 = arith.constant 0 : index
    %c0_120 = arith.constant 0 : index
    %226 = vector.load %arg4[%c21_118, %c0_119, %c0_120] : memref<25x4x1xf32, #tpu.memory_space<vmem>>, vector<1x4x1xf32>
    %227 = vector.shape_cast %226 : vector<1x4x1xf32> to vector<4x1xf32>
    %228 = vector.broadcast %225 : vector<1x256xf32> to vector<4x256xf32>
    %229 = vector.broadcast %227 : vector<4x1xf32> to vector<4x256xf32>
    %230 = arith.mulf %228, %229 : vector<4x256xf32>
    %231 = arith.mulf %223, %230 : vector<4x256xf32>
    %232 = arith.addf %222, %231 : vector<4x256xf32>
    %c224_i32 = arith.constant 224 : i32
    %233 = tpu.dynamic_rotate %15 by %c224_i32 dim 1 : vector<4x256xf32>, i32 -> vector<4x256xf32>
    %c22 = arith.constant 22 : index
    %c0_121 = arith.constant 0 : index
    %c0_122 = arith.constant 0 : index
    %234 = vector.load %arg6[%c22, %c0_121, %c0_122] : memref<25x1x256xf32, #tpu.memory_space<vmem>>, vector<1x1x256xf32>
    %235 = vector.shape_cast %234 : vector<1x1x256xf32> to vector<1x256xf32>
    %c22_123 = arith.constant 22 : index
    %c0_124 = arith.constant 0 : index
    %c0_125 = arith.constant 0 : index
    %236 = vector.load %arg4[%c22_123, %c0_124, %c0_125] : memref<25x4x1xf32, #tpu.memory_space<vmem>>, vector<1x4x1xf32>
    %237 = vector.shape_cast %236 : vector<1x4x1xf32> to vector<4x1xf32>
    %238 = vector.broadcast %235 : vector<1x256xf32> to vector<4x256xf32>
    %239 = vector.broadcast %237 : vector<4x1xf32> to vector<4x256xf32>
    %240 = arith.mulf %238, %239 : vector<4x256xf32>
    %241 = arith.mulf %233, %240 : vector<4x256xf32>
    %242 = arith.addf %232, %241 : vector<4x256xf32>
    %c223_i32 = arith.constant 223 : i32
    %243 = tpu.dynamic_rotate %15 by %c223_i32 dim 1 : vector<4x256xf32>, i32 -> vector<4x256xf32>
    %c23 = arith.constant 23 : index
    %c0_126 = arith.constant 0 : index
    %c0_127 = arith.constant 0 : index
    %244 = vector.load %arg6[%c23, %c0_126, %c0_127] : memref<25x1x256xf32, #tpu.memory_space<vmem>>, vector<1x1x256xf32>
    %245 = vector.shape_cast %244 : vector<1x1x256xf32> to vector<1x256xf32>
    %c23_128 = arith.constant 23 : index
    %c0_129 = arith.constant 0 : index
    %c0_130 = arith.constant 0 : index
    %246 = vector.load %arg4[%c23_128, %c0_129, %c0_130] : memref<25x4x1xf32, #tpu.memory_space<vmem>>, vector<1x4x1xf32>
    %247 = vector.shape_cast %246 : vector<1x4x1xf32> to vector<4x1xf32>
    %248 = vector.broadcast %245 : vector<1x256xf32> to vector<4x256xf32>
    %249 = vector.broadcast %247 : vector<4x1xf32> to vector<4x256xf32>
    %250 = arith.mulf %248, %249 : vector<4x256xf32>
    %251 = arith.mulf %243, %250 : vector<4x256xf32>
    %252 = arith.addf %242, %251 : vector<4x256xf32>
    %c222_i32 = arith.constant 222 : i32
    %253 = tpu.dynamic_rotate %15 by %c222_i32 dim 1 : vector<4x256xf32>, i32 -> vector<4x256xf32>
    %c24 = arith.constant 24 : index
    %c0_131 = arith.constant 0 : index
    %c0_132 = arith.constant 0 : index
    %254 = vector.load %arg6[%c24, %c0_131, %c0_132] : memref<25x1x256xf32, #tpu.memory_space<vmem>>, vector<1x1x256xf32>
    %255 = vector.shape_cast %254 : vector<1x1x256xf32> to vector<1x256xf32>
    %c24_133 = arith.constant 24 : index
    %c0_134 = arith.constant 0 : index
    %c0_135 = arith.constant 0 : index
    %256 = vector.load %arg4[%c24_133, %c0_134, %c0_135] : memref<25x4x1xf32, #tpu.memory_space<vmem>>, vector<1x4x1xf32>
    %257 = vector.shape_cast %256 : vector<1x4x1xf32> to vector<4x1xf32>
    %258 = vector.broadcast %255 : vector<1x256xf32> to vector<4x256xf32>
    %259 = vector.broadcast %257 : vector<4x1xf32> to vector<4x256xf32>
    %260 = arith.mulf %258, %259 : vector<4x256xf32>
    %261 = arith.mulf %253, %260 : vector<4x256xf32>
    %262 = arith.addf %252, %261 : vector<4x256xf32>
    %c0_136 = arith.constant 0 : index
    %c0_137 = arith.constant 0 : index
    %263 = vector.load %arg5[%c0_136, %c0_137] : memref<4x1xf32, #tpu.memory_space<vmem>>, vector<4x1xf32>
    %264 = vector.broadcast %263 : vector<4x1xf32> to vector<4x256xf32>
    %265 = arith.addf %262, %264 : vector<4x256xf32>
    %cst_138 = arith.constant 3.000000e+00 : f32
    %266 = vector.broadcast %cst_138 : f32 to vector<4x256xf32>
    %267 = arith.addf %265, %266 : vector<4x256xf32>
    %cst_139 = arith.constant 0.000000e+00 : f32
    %cst_140 = arith.constant 6.000000e+00 : f32
    %268 = vector.broadcast %cst_139 : f32 to vector<4x256xf32>
    %269 = arith.maximumf %268, %267 : vector<4x256xf32>
    %270 = vector.broadcast %cst_140 : f32 to vector<4x256xf32>
    %271 = arith.minimumf %270, %269 : vector<4x256xf32>
    %272 = arith.mulf %265, %271 : vector<4x256xf32>
    %cst_141 = arith.constant 0.166666672 : f32
    %273 = vector.broadcast %cst_141 : f32 to vector<4x256xf32>
    %274 = arith.mulf %272, %273 : vector<4x256xf32>
    %c0_142 = arith.constant 0 : index
    %c4_143 = arith.constant 4 : index
    %c0_144 = arith.constant 0 : index
    %275 = vector.load %arg7[%c0_142, %c4_143, %c0_144] : memref<1x8x256xf32, #tpu.memory_space<vmem>>, vector<1x4x256xf32>
    %276 = vector.shape_cast %275 : vector<1x4x256xf32> to vector<4x256xf32>
    %277 = vector.shape_cast %274 : vector<4x256xf32> to vector<1x4x256xf32>
    tpu.vector_store %arg7[%c0_142, %c4_143, %c0_144], %277 {strides = array<i32>} : memref<1x8x256xf32, #tpu.memory_space<vmem>>, vector<1x4x256xf32>,
    return
  }
  func.func @transform_0(%arg0: i32) -> (i32, i32, i32) {
    %c0_i32 = arith.constant 0 : i32
    %c0_i32_0 = arith.constant 0 : i32
    %c0_i32_1 = arith.constant 0 : i32
    return %arg0, %c0_i32, %c0_i32_0 : i32, i32, i32
  }
  func.func @transform_1(%arg0: i32) -> (i32, i32) {
    %c0_i32 = arith.constant 0 : i32
    %c0_i32_0 = arith.constant 0 : i32
    %c0_i32_1 = arith.constant 0 : i32
    return %c0_i32, %c0_i32_0 : i32, i32
  }
  func.func @transform_2(%arg0: i32) -> (i32, i32) {
    %c0_i32 = arith.constant 0 : i32
    %c0_i32_0 = arith.constant 0 : i32
    %c0_i32_1 = arith.constant 0 : i32
    return %c0_i32, %c0_i32_0 : i32, i32
  }
  func.func @transform_3(%arg0: i32) -> (i32, i32, i32) {
    %c0_i32 = arith.constant 0 : i32
    %c0_i32_0 = arith.constant 0 : i32
    %c0_i32_1 = arith.constant 0 : i32
    %c0_i32_2 = arith.constant 0 : i32
    return %c0_i32, %c0_i32_0, %c0_i32_1 : i32, i32, i32
  }
  func.func @transform_4(%arg0: i32) -> (i32, i32) {
    %c0_i32 = arith.constant 0 : i32
    %c0_i32_0 = arith.constant 0 : i32
    %c0_i32_1 = arith.constant 0 : i32
    return %c0_i32, %c0_i32_0 : i32, i32
  }
  func.func @transform_5(%arg0: i32) -> (i32, i32, i32) {
    %c0_i32 = arith.constant 0 : i32
    %c0_i32_0 = arith.constant 0 : i32
    %c0_i32_1 = arith.constant 0 : i32
    %c0_i32_2 = arith.constant 0 : i32
    return %c0_i32, %c0_i32_0, %c0_i32_1 : i32, i32, i32
  }
  func.func @transform_6(%arg0: i32) -> (i32, i32, i32) {
    %c0_i32 = arith.constant 0 : i32
    %c0_i32_0 = arith.constant 0 : i32
    %c0_i32_1 = arith.constant 0 : i32
    return %arg0, %c0_i32, %c0_i32_0 : i32, i32, i32
  }
}

</mosaic_0001>

<llo_original>
// kernel: tpu_custom_call.1
$region0: #{tpu_custom_call.1}
  #allocation0 [shape = 'u32[]', space=smem, size = 0x4, offset = 0x4, fixed_abs, tag = 'smem constant byte address 0x4 - core index']
  #allocation1 [shape = 'u32[144,128]{1,0:T(1,128)}', space=vmem, size = 0x12000, scoped, tag = 'internal scratch']
  %s0 = inlined_call_operand.vmem [shape: f32[2,4,256], index: 0, kind: input, shape index: {}]
  %s1 = inlined_call_operand.vmem [shape: f32[4,4], index: 1, kind: input, shape index: {}]
  %s2 = inlined_call_operand.vmem [shape: f32[4,1], index: 2, kind: input, shape index: {}]
  %s3 = inlined_call_operand.vmem [shape: f32[25,4,1], index: 3, kind: input, shape index: {}]
  %s4 = inlined_call_operand.vmem [shape: f32[4,1], index: 4, kind: input, shape index: {}]
  %s5 = inlined_call_operand.vmem [shape: f32[25,1,256], index: 5, kind: input, shape index: {}]
  %s6 = inlined_call_operand.hbm [shape: f32[2,8,256], index: 6, kind: output, shape index: {}]
  %s7 = sld [smem:[#allocation0]]
  $region57: #{tpu_custom_call.1} parent=0
    _
  %s9 = ssub.s32 1, %s7
  %s10 = scalar_select 0, %s9, %s7
  $region1: #{tpu_custom_call.1} parent=0
    #allocation2 [shape = 'u8[16384]{0}', space=vmem, size = 0x4000, scoped, tag = 'output window, operand 0']
    #allocation3 [shape = 's32[2]{0}', space=sflag, size = 0x8, scoped, tag = 'scoped memory for tpu_custom_call.1']
    %11 = vsyncpa [#allocation3], 0
    %s12 = scalar_lea.sflag [#allocation3], 1
    %13 = vsyncpa %s12, 0
    loop: start=0, step=1, limit=4
    $region2: #{tpu_custom_call.1} parent=1 // loop_pre_header
      _
    $region3: #{tpu_custom_call.1} parent=1 // loop_header
      %s15 = sphi 0, %s19
      %p16 = scmp.ge.s32.totalorder %s15, 4
      %s25 = sphi 0, %s27
      %s28 = sphi 0, %s25
      %s29 = sphi 0, %s28
      %s45 = sphi 0, %s29
      %s49 = sphi 0, %s49
      %s51 = sphi 0, %s49
      %s52 = sphi 0, %s51
      %s66 = sphi 0, %s52
      %s70 = sphi 0, %s70
      %s72 = sphi 0, %s70
      %s73 = sphi 0, %s72
      %s87 = sphi 0, %s73
      %s91 = sphi 0, %s91
      %s93 = sphi 0, %s91
      %s94 = sphi 0, %s93
      %s108 = sphi 0, %s94
      %s112 = sphi 0, %s112
      %s114 = sphi 0, %s112
      %s115 = sphi 0, %s114
      %s129 = sphi 0, %s115
      %s133 = sphi 0, %s133
      %s135 = sphi 0, %s133
      %s136 = sphi 0, %s135
      %s150 = sphi 0, %s136
      %s156 = sphi 0, %s158
      %s159 = sphi 0, %s156
      %s160 = sphi 0, %s159
      %s176 = sphi 0, %s160
    $region4: #{tpu_custom_call.1} parent=1 // loop_header_branch
      %18 = sbr.rel (%p16) target = $region8
    $region5: #{tpu_custom_call.1} parent=1 // loop_body
      %s20 = ssub.s32 %s15, 1
      %s21 = ssub.s32 %s15, 2
      %s22 = sadd.s32 %s15, 1
      %s23 = ssub.s32 %s15, %s22
      %p24 = scmp.eq.s32.totalorder %s23, 0
      %s26 = sadd.s32 %s25, 1
      %s27 = scalar_select %p24, %s25, %s26
      %p30 = pneg %p24
      %p31 = scmp.eq.s32.totalorder %s15, 1
      %p32 = por %p30, %p31
      %p33 = scmp.ne.s32.totalorder %s25, %s28
      %p34 = scmp.eq.s32.totalorder %s15, 0
      %p35 = por %p33, %p34
      %p36 = scmp.ne.s32.totalorder %s25, %s28
      %p37 = scmp.eq.s32.totalorder %s20, 1
      %p38 = por %p36, %p37
      %p39 = scmp.ne.s32.totalorder %s28, %s29
      %p40 = scmp.eq.s32.totalorder %s20, 0
      %p41 = por %p39, %p40
      %p42 = scmp.ne.s32.totalorder %s28, %s29
      %p43 = scmp.eq.s32.totalorder %s21, 1
      %p44 = por %p42, %p43
      %p46 = scmp.ne.s32.totalorder %s29, %s45
      %p47 = scmp.eq.s32.totalorder %s21, 0
      %p48 = por %p46, %p47
      %s50 = sadd.s32 %s49, 1
      %p53 = scmp.eq.s32.totalorder %s15, 1
      %p54 = scmp.ne.s32.totalorder %s49, %s51
      %p55 = scmp.eq.s32.totalorder %s15, 0
      %p56 = por %p54, %p55
      %p57 = scmp.ne.s32.totalorder %s49, %s51
      %p58 = scmp.eq.s32.totalorder %s20, 1
      %p59 = por %p57, %p58
      %p60 = scmp.ne.s32.totalorder %s51, %s52
      %p61 = scmp.eq.s32.totalorder %s20, 0
      %p62 = por %p60, %p61
      %p63 = scmp.ne.s32.totalorder %s51, %s52
      %p64 = scmp.eq.s32.totalorder %s21, 1
      %p65 = por %p63, %p64
      %p67 = scmp.ne.s32.totalorder %s52, %s66
      %p68 = scmp.eq.s32.totalorder %s21, 0
      %p69 = por %p67, %p68
      %s71 = sadd.s32 %s70, 1
      %p74 = scmp.eq.s32.totalorder %s15, 1
      %p75 = scmp.ne.s32.totalorder %s70, %s72
      %p76 = scmp.eq.s32.totalorder %s15, 0
      %p77 = por %p75, %p76
      %p78 = scmp.ne.s32.totalorder %s70, %s72
      %p79 = scmp.eq.s32.totalorder %s20, 1
      %p80 = por %p78, %p79
      %p81 = scmp.ne.s32.totalorder %s72, %s73
      %p82 = scmp.eq.s32.totalorder %s20, 0
      %p83 = por %p81, %p82
      %p84 = scmp.ne.s32.totalorder %s72, %s73
      %p85 = scmp.eq.s32.totalorder %s21, 1
      %p86 = por %p84, %p85
      %p88 = scmp.ne.s32.totalorder %s73, %s87
      %p89 = scmp.eq.s32.totalorder %s21, 0
      %p90 = por %p88, %p89
      %s92 = sadd.s32 %s91, 1
      %p95 = scmp.eq.s32.totalorder %s15, 1
      %p96 = scmp.ne.s32.totalorder %s91, %s93
      %p97 = scmp.eq.s32.totalorder %s15, 0
      %p98 = por %p96, %p97
      %p99 = scmp.ne.s32.totalorder %s91, %s93
      %p100 = scmp.eq.s32.totalorder %s20, 1
      %p101 = por %p99, %p100
      %p102 = scmp.ne.s32.totalorder %s93, %s94
      %p103 = scmp.eq.s32.totalorder %s20, 0
      %p104 = por %p102, %p103
      %p105 = scmp.ne.s32.totalorder %s93, %s94
      %p106 = scmp.eq.s32.totalorder %s21, 1
      %p107 = por %p105, %p106
      %p109 = scmp.ne.s32.totalorder %s94, %s108
      %p110 = scmp.eq.s32.totalorder %s21, 0
      %p111 = por %p109, %p110
      %s113 = sadd.s32 %s112, 1
      %p116 = scmp.eq.s32.totalorder %s15, 1
      %p117 = scmp.ne.s32.totalorder %s112, %s114
      %p118 = scmp.eq.s32.totalorder %s15, 0
      %p119 = por %p117, %p118
      %p120 = scmp.ne.s32.totalorder %s112, %s114
      %p121 = scmp.eq.s32.totalorder %s20, 1
      %p122 = por %p120, %p121
      %p123 = scmp.ne.s32.totalorder %s114, %s115
      %p124 = scmp.eq.s32.totalorder %s20, 0
      %p125 = por %p123, %p124
      %p126 = scmp.ne.s32.totalorder %s114, %s115
      %p127 = scmp.eq.s32.totalorder %s21, 1
      %p128 = por %p126, %p127
      %p130 = scmp.ne.s32.totalorder %s115, %s129
      %p131 = scmp.eq.s32.totalorder %s21, 0
      %p132 = por %p130, %p131
      %s134 = sadd.s32 %s133, 1
      %p137 = scmp.eq.s32.totalorder %s15, 1
      %p138 = scmp.ne.s32.totalorder %s133, %s135
      %p139 = scmp.eq.s32.totalorder %s15, 0
      %p140 = por %p138, %p139
      %p141 = scmp.ne.s32.totalorder %s133, %s135
      %p142 = scmp.eq.s32.totalorder %s20, 1
      %p143 = por %p141, %p142
      %p144 = scmp.ne.s32.totalorder %s135, %s136
      %p145 = scmp.eq.s32.totalorder %s20, 0
      %p146 = por %p144, %p145
      %p147 = scmp.ne.s32.totalorder %s135, %s136
      %p148 = scmp.eq.s32.totalorder %s21, 1
      %p149 = por %p147, %p148
      %p151 = scmp.ne.s32.totalorder %s136, %s150
      %p152 = scmp.eq.s32.totalorder %s21, 0
      %p153 = por %p151, %p152
      %s154 = ssub.s32 %s15, %s22
      %p155 = scmp.eq.s32.totalorder %s154, 0
      %s157 = sadd.s32 %s156, 1
      %s158 = scalar_select %p155, %s156, %s157
      %p161 = pneg %p155
      %p162 = scmp.eq.s32.totalorder %s15, 1
      %p163 = por %p161, %p162
      %p164 = scmp.ne.s32.totalorder %s156, %s159
      %p165 = scmp.eq.s32.totalorder %s15, 0
      %p166 = por %p164, %p165
      %p167 = scmp.ne.s32.totalorder %s156, %s159
      %p168 = scmp.eq.s32.totalorder %s20, 1
      %p169 = por %p167, %p168
      %p170 = scmp.ne.s32.totalorder %s159, %s160
      %p171 = scmp.eq.s32.totalorder %s20, 0
      %p172 = por %p170, %p171
      %p173 = scmp.ne.s32.totalorder %s159, %s160
      %p174 = scmp.eq.s32.totalorder %s21, 1
      %p175 = por %p173, %p174
      %p177 = scmp.ne.s32.totalorder %s160, %s176
      %p178 = scmp.eq.s32.totalorder %s21, 0
      %p179 = por %p177, %p178
      %p180 = scmp.le.s32.totalorder 1, %s15
      %p181 = scmp.lt.s32.totalorder %s15, 3
      %p182 = pnand %p180, %p181
      %p183 = pneg %p182
      // Predicated region
      $region9: #{tpu_custom_call.1} parent=5 // pred_check
        _
      $region10: #{tpu_custom_call.1} parent=5 // pred_check_branch
        %185 = sbr.rel (%p182) target = $region12
      $region11: #{tpu_custom_call.1} parent=5 // pred_region
        %s186 = ssub.s32 %s15, 1
        // Predicated region
        $region13: #{tpu_custom_call.1} parent=11 // pred_check
          %p187 = pneg %p62
        $region14: #{tpu_custom_call.1} parent=11 // pred_check_branch
          %189 = sbr.rel (%p187) target = $region16
        $region15: #{tpu_custom_call.1} parent=11 // pred_region
          _
        $region16: #{tpu_custom_call.1} parent=11 // pred_fallthru
          _
        // Predicated region
        $region17: #{tpu_custom_call.1} parent=11 // pred_check
          %p190 = pneg %p83
        $region18: #{tpu_custom_call.1} parent=11 // pred_check_branch
          %192 = sbr.rel (%p190) target = $region20
        $region19: #{tpu_custom_call.1} parent=11 // pred_region
          _
        $region20: #{tpu_custom_call.1} parent=11 // pred_fallthru
          _
        // Predicated region
        $region21: #{tpu_custom_call.1} parent=11 // pred_check
          %p193 = pneg %p104
        $region22: #{tpu_custom_call.1} parent=11 // pred_check_branch
          %195 = sbr.rel (%p193) target = $region24
        $region23: #{tpu_custom_call.1} parent=11 // pred_region
          _
        $region24: #{tpu_custom_call.1} parent=11 // pred_fallthru
          _
        // Predicated region
        $region25: #{tpu_custom_call.1} parent=11 // pred_check
          %p196 = pneg %p125
        $region26: #{tpu_custom_call.1} parent=11 // pred_check_branch
          %198 = sbr.rel (%p196) target = $region28
        $region27: #{tpu_custom_call.1} parent=11 // pred_region
          _
        $region28: #{tpu_custom_call.1} parent=11 // pred_fallthru
          _
        // Predicated region
        $region29: #{tpu_custom_call.1} parent=11 // pred_check
          %p199 = pneg %p146
        $region30: #{tpu_custom_call.1} parent=11 // pred_check_branch
          %201 = sbr.rel (%p199) target = $region32
        $region31: #{tpu_custom_call.1} parent=11 // pred_region
          _
        $region32: #{tpu_custom_call.1} parent=11 // pred_fallthru
          _
      $region12: #{tpu_custom_call.1} parent=5 // pred_fallthru
        _
      %p202 = scmp.lt.s32.totalorder %s15, 2
      // Predicated region
      $region33: #{tpu_custom_call.1} parent=5 // pred_check
        %p203 = pneg %p202
      $region34: #{tpu_custom_call.1} parent=5 // pred_check_branch
        %205 = sbr.rel (%p203) target = $region36
      $region35: #{tpu_custom_call.1} parent=5 // pred_region
        // Predicated region
        $region37: #{tpu_custom_call.1} parent=35 // pred_check
          %p206 = pneg %p35
        $region38: #{tpu_custom_call.1} parent=35 // pred_check_branch
          %208 = sbr.rel (%p206) target = $region40
        $region39: #{tpu_custom_call.1} parent=35 // pred_region
          %p209 = scmp.lt.s32.totalorder %s15, 1
          %s210 = scalar_select %p209, %s15, 1
          %s211 = smul.addr %s210, 2
          %s212 = smul.addr %s211, 4
          %s213 = scalar_lea.vmem %s0, %s212
        $region40: #{tpu_custom_call.1} parent=35 // pred_fallthru
          _
      $region36: #{tpu_custom_call.1} parent=5 // pred_fallthru
        _
      %p214 = scmp.le.s32.totalorder 1, %s15
      %p215 = scmp.lt.s32.totalorder %s15, 3
      %p216 = pnand %p214, %p215
      %p217 = pneg %p216
      // Predicated region
      $region41: #{tpu_custom_call.1} parent=5 // pred_check
        _
      $region42: #{tpu_custom_call.1} parent=5 // pred_check_branch
        %219 = sbr.rel (%p216) target = $region44
      $region43: #{tpu_custom_call.1} parent=5 // pred_region
        %s220 = ssub.s32 %s15, 1
        %p221 = scmp.lt.s32.totalorder %s20, 1
        %s222 = scalar_select %p221, %s20, 1
        %s223 = smul.addr %s222, 2
        %s224 = smul.addr %s223, 4
        %s225 = scalar_lea.vmem %s0, %s224
        %p226 = pneg %p41
        %p227 = pneg %p38
        %p228 = pneg %p62
        %p229 = pneg %p59
        %p230 = pneg %p83
        %p231 = pneg %p80
        %p232 = pneg %p104
        %p233 = pneg %p101
        %p234 = pneg %p125
        %p235 = pneg %p122
        %p236 = pneg %p146
        %p237 = pneg %p143
        %p238 = pneg %p172
        %p239 = pneg %p169
        %s240 = sand.u32 %s159, 1
        %s241 = scalar_lea.sflag [#allocation3], %s240
        %s242 = sand.u32 %s159, 1
        %s243 = smul.addr %s242, 16
        %s244 = scalar_lea.vmem [#allocation2], %s243
        %p245 = scmp.lt.s32.totalorder %s20, 1
        %s246 = scalar_select %p245, %s20, 1
        %s247 = smul.addr %s246, 2
        %s248 = smul.addr %s247, 4
        %s249 = scalar_lea.vmem %s0, %s248
        %v250 = vld [vmem:[%s249] sm:$0xff]
        %v251 = vld [vmem:[%s1] sm:$0xf]
        %v252 = vld [vmem:[%s2] sm:$0xf]
        %254 = vset.pattern.permute.xlu0 0
        %255 = vperm.xlu0 %254, %v252
        %v256 = vpop.permute.xlu0 %255
        %v259 = vcombine.high %v250, %v250
        %vm260 = vcmask 31744
        %v262 = vsel %vm260, %v251, 0
        %vm264 = vcmask 1043456
        %v265 = vsel %vm264, %v250, 0
        %v267 = vsel %vm264, %v259, 0
        %269 = vmatprep.subr.mxu0 %v267
        %270 = vmatpush1.msra.mxu0 %v265
        %271 = vmatprep.subr.mxu0 0.0
        %272 = vmatpush1.msra.mxu0 0.0
        %273 = vmatprep.subr.mxu0 0.0
        %274 = vmatpush1.msra.mxu0 0.0
        %275 = vmatprep.subr.mxu0 0.0
        %276 = vmatpush1.msra.mxu0 0.0
        %277 = vmatprep.subr.mxu0 0.0
        %278 = vmatpush1.msra.mxu0 0.0
        %279 = vmatprep.subr.mxu0 0.0
        %280 = vmatpush1.msra.mxu0 0.0
        %281 = vmatprep.subr.mxu0 0.0
        %282 = vmatpush1.msra.mxu0 0.0
        %283 = vmatprep.subr.mxu0 0.0
        %284 = vmatpush1.msra.mxu0 0.0
        %285 = vmatprep.subr.mxu0 0.0
        %286 = vmatpush1.msra.mxu0 0.0
        %287 = vmatprep.subr.mxu0 0.0
        %288 = vmatpush1.msra.mxu0 0.0
        %289 = vmatprep.subr.mxu0 0.0
        %290 = vmatpush1.msra.mxu0 0.0
        %291 = vmatprep.subr.mxu0 0.0
        %292 = vmatpush1.msra.mxu0 0.0
        %293 = vmatprep.subr.mxu0 0.0
        %294 = vmatpush1.msra.mxu0 0.0
        %295 = vmatprep.subr.mxu0 0.0
        %296 = vmatpush1.msra.mxu0 0.0
        %297 = vmatprep.subr.mxu0 0.0
        %298 = vmatpush1.msra.mxu0 0.0
        %299 = vmatprep.subr.mxu0 0.0
        %300 = vmatpush1.msra.mxu0 0.0
        %301 = vmatprep.subr.mxu0 0.0
        %302 = vmatpush1.msra.mxu0 0.0
        %303 = vmatprep.subr.mxu0 0.0
        %304 = vmatpush1.msra.mxu0 0.0
        %305 = vmatprep.subr.mxu0 0.0
        %306 = vmatpush1.msra.mxu0 0.0
        %307 = vmatprep.subr.mxu0 0.0
        %308 = vmatpush1.msra.mxu0 0.0
        %309 = vmatprep.subr.mxu0 0.0
        %310 = vmatpush1.msra.mxu0 0.0
        %311 = vmatprep.subr.mxu0 0.0
        %312 = vmatpush1.msra.mxu0 0.0
        %313 = vmatprep.subr.mxu0 0.0
        %314 = vmatpush1.msra.mxu0 0.0
        %315 = vmatprep.subr.mxu0 0.0
        %316 = vmatpush1.msra.mxu0 0.0
        %317 = vmatprep.subr.mxu0 0.0
        %318 = vmatpush1.msra.mxu0 0.0
        %319 = vmatprep.subr.mxu0 0.0
        %320 = vmatpush1.msra.mxu0 0.0
        %321 = vmatprep.subr.mxu0 0.0
        %322 = vmatpush1.msra.mxu0 0.0
        %323 = vmatprep.subr.mxu0 0.0
        %324 = vmatpush1.msra.mxu0 0.0
        %325 = vmatprep.subr.mxu0 0.0
        %326 = vmatpush1.msra.mxu0 0.0
        %327 = vmatprep.subr.mxu0 0.0
        %328 = vmatpush1.msra.mxu0 0.0
        %329 = vmatprep.subr.mxu0 0.0
        %330 = vmatpush1.msra.mxu0 0.0
        %331 = vmatprep.subr.mxu0 0.0
        %332 = vmatpush1.msra.mxu0 0.0
        %333 = vmatprep.mubr.f32.mxu0 0.0
        %334 = vmatmul.mubr.f32.gmra.mrb[0].mxu0 %v262
        %v335 = vpop.f32.mrb[0].mxu0
        %v336 = vadd.f32 %v256, %v335
        %v337 = vpop.f32.mrb[0].mxu0
        %v338 = vadd.f32 %v256, %v337
        %339 = vdwg.mxu0
        %v340 = vadd.f32 %v336, 3.0
        %v341 = vadd.f32 %v338, 3.0
        %v342 = vmax.f32 %v340, 0.0
        %v343 = vmax.f32 %v341, 0.0
        %v344 = vmin.f32 %v342, 6.0
        %v345 = vmin.f32 %v343, 6.0
        %v346 = vmul.f32 %v336, %v344
        %v347 = vmul.f32 %v338, %v345
        %v348 = vmul.f32 %v346, 0.16666667
        %v349 = vmul.f32 %v347, 0.16666667
        %350 = vst [vmem:[%s244] sm:$0xf] %v348
        %351 = vst [vmem:[%s244 + $0x8] sm:$0xf] %v349
        %s352 = scalar_lea.vmem %s3, 48
        %v353 = vld [vmem:[%s352] sm:$0xf]
        %355 = vset.pattern.permute.xlu0 0
        %356 = vperm.xlu0 %355, %v353
        %v357 = vpop.permute.xlu0 %356
        %v359 = vmul.f32 %v348, %v357
        %v360 = vmul.f32 %v349, %v357
        %361 = vrot.lane.b32.xlu0 %v348, 34
        %v362 = vpop.permute.xlu0 %361
        %363 = vrot.lane.b32.xlu0 %v349, 34
        %v364 = vpop.permute.xlu0 %363
        %v365 = vlaneseq
        %v366 = vand.u32 %v365, 127
        %vm367 = vcmp.lt.s32.totalorder %v366, 34
        %v368 = vsel %vm367, %v362, %v364
        %v369 = vsel %vm367, %v364, %v362
        %v370 = vld [vmem:[%s5] sm:$0x3]
        %v371 = vld [vmem:[%s3] sm:$0xf]
        %v373 = vlaneseq
        %v374 = vshrl.u32 %v373, 7
        %v375 = vsub.s32 0, %v374
        %v376 = vrot.slane %v370, %v375
        %v377 = vlaneseq
        %v378 = vshrl.u32 %v377, 7
        %v379 = vsub.s32 1, %v378
        %v380 = vrot.slane %v370, %v379
        %384 = vset.pattern.permute.xlu0 0
        %385 = vperm.xlu0 %384, %v371
        %v386 = vpop.permute.xlu0 %385
        %v388 = vmul.f32 %v376, %v386
        %v389 = vmul.f32 %v380, %v386
        %v390 = vmul.f32 %v369, %v388
        %v391 = vmul.f32 %v368, %v389
        %v392 = vadd.f32 %v359, %v390
        %v393 = vadd.f32 %v360, %v391
        %394 = vrot.lane.b32.xlu0 %v348, 33
        %v395 = vpop.permute.xlu0 %394
        %396 = vrot.lane.b32.xlu0 %v349, 33
        %v397 = vpop.permute.xlu0 %396
        %vm398 = vcmp.lt.s32.totalorder %v366, 33
        %v399 = vsel %vm398, %v395, %v397
        %v400 = vsel %vm398, %v397, %v395
        %s401 = scalar_lea.vmem %s5, 2
        %v402 = vld [vmem:[%s401] sm:$0x3]
        %s403 = scalar_lea.vmem %s3, 4
        %v404 = vld [vmem:[%s403] sm:$0xf]
        %v406 = vlaneseq
        %v407 = vshrl.u32 %v406, 7
        %v408 = vsub.s32 0, %v407
        %v409 = vrot.slane %v402, %v408
        %v410 = vlaneseq
        %v411 = vshrl.u32 %v410, 7
        %v412 = vsub.s32 1, %v411
        %v413 = vrot.slane %v402, %v412
        %417 = vset.pattern.permute.xlu0 0
        %418 = vperm.xlu0 %417, %v404
        %v419 = vpop.permute.xlu0 %418
        %v421 = vmul.f32 %v409, %v419
        %v422 = vmul.f32 %v413, %v419
        %v423 = vmul.f32 %v400, %v421
        %v424 = vmul.f32 %v399, %v422
        %v425 = vadd.f32 %v392, %v423
        %v426 = vadd.f32 %v393, %v424
        %427 = vrot.lane.b32.xlu0 %v348, 32
        %v428 = vpop.permute.xlu0 %427
        %429 = vrot.lane.b32.xlu0 %v349, 32
        %v430 = vpop.permute.xlu0 %429
        %vm431 = vcmp.lt.s32.totalorder %v366, 32
        %v432 = vsel %vm431, %v428, %v430
        %v433 = vsel %vm431, %v430, %v428
        %s434 = scalar_lea.vmem %s5, 4
        %v435 = vld [vmem:[%s434] sm:$0x3]
        %s436 = scalar_lea.vmem %s3, 8
        %v437 = vld [vmem:[%s436] sm:$0xf]
        %v439 = vlaneseq
        %v440 = vshrl.u32 %v439, 7
        %v441 = vsub.s32 0, %v440
        %v442 = vrot.slane %v435, %v441
        %v443 = vlaneseq
        %v444 = vshrl.u32 %v443, 7
        %v445 = vsub.s32 1, %v444
        %v446 = vrot.slane %v435, %v445
        %450 = vset.pattern.permute.xlu0 0
        %451 = vperm.xlu0 %450, %v437
        %v452 = vpop.permute.xlu0 %451
        %v454 = vmul.f32 %v442, %v452
        %v455 = vmul.f32 %v446, %v452
        %v456 = vmul.f32 %v433, %v454
        %v457 = vmul.f32 %v432, %v455
        %v458 = vadd.f32 %v425, %v456
        %v459 = vadd.f32 %v426, %v457
        %460 = vrot.lane.b32.xlu0 %v348, 31
        %v461 = vpop.permute.xlu0 %460
        %462 = vrot.lane.b32.xlu0 %v349, 31
        %v463 = vpop.permute.xlu0 %462
        %vm464 = vcmp.lt.s32.totalorder %v366, 31
        %v465 = vsel %vm464, %v461, %v463
        %v466 = vsel %vm464, %v463, %v461
        %s467 = scalar_lea.vmem %s5, 6
        %v468 = vld [vmem:[%s467] sm:$0x3]
        %s469 = scalar_lea.vmem %s3, 12
        %v470 = vld [vmem:[%s469] sm:$0xf]
        %v472 = vlaneseq
        %v473 = vshrl.u32 %v472, 7
        %v474 = vsub.s32 0, %v473
        %v475 = vrot.slane %v468, %v474
        %v476 = vlaneseq
        %v477 = vshrl.u32 %v476, 7
        %v478 = vsub.s32 1, %v477
        %v479 = vrot.slane %v468, %v478
        %483 = vset.pattern.permute.xlu0 0
        %484 = vperm.xlu0 %483, %v470
        %v485 = vpop.permute.xlu0 %484
        %v487 = vmul.f32 %v475, %v485
        %v488 = vmul.f32 %v479, %v485
        %v489 = vmul.f32 %v466, %v487
        %v490 = vmul.f32 %v465, %v488
        %v491 = vadd.f32 %v458, %v489
        %v492 = vadd.f32 %v459, %v490
        %493 = vrot.lane.b32.xlu0 %v348, 30
        %v494 = vpop.permute.xlu0 %493
        %495 = vrot.lane.b32.xlu0 %v349, 30
        %v496 = vpop.permute.xlu0 %495
        %vm497 = vcmp.lt.s32.totalorder %v366, 30
        %v498 = vsel %vm497, %v494, %v496
        %v499 = vsel %vm497, %v496, %v494
        %s500 = scalar_lea.vmem %s5, 8
        %v501 = vld [vmem:[%s500] sm:$0x3]
        %s502 = scalar_lea.vmem %s3, 16
        %v503 = vld [vmem:[%s502] sm:$0xf]
        %v505 = vlaneseq
        %v506 = vshrl.u32 %v505, 7
        %v507 = vsub.s32 0, %v506
        %v508 = vrot.slane %v501, %v507
        %v509 = vlaneseq
        %v510 = vshrl.u32 %v509, 7
        %v511 = vsub.s32 1, %v510
        %v512 = vrot.slane %v501, %v511
        %516 = vset.pattern.permute.xlu0 0
        %517 = vperm.xlu0 %516, %v503
        %v518 = vpop.permute.xlu0 %517
        %v520 = vmul.f32 %v508, %v518
        %v521 = vmul.f32 %v512, %v518
        %v522 = vmul.f32 %v499, %v520
        %v523 = vmul.f32 %v498, %v521
        %v524 = vadd.f32 %v491, %v522
        %v525 = vadd.f32 %v492, %v523
        %526 = vrot.lane.b32.xlu0 %v348, 18
        %v527 = vpop.permute.xlu0 %526
        %528 = vrot.lane.b32.xlu0 %v349, 18
        %v529 = vpop.permute.xlu0 %528
        %vm530 = vcmp.lt.s32.totalorder %v366, 18
        %v531 = vsel %vm530, %v527, %v529
        %v532 = vsel %vm530, %v529, %v527
        %s533 = scalar_lea.vmem %s5, 10
        %v534 = vld [vmem:[%s533] sm:$0x3]
        %s535 = scalar_lea.vmem %s3, 20
        %v536 = vld [vmem:[%s535] sm:$0xf]
        %v538 = vlaneseq
        %v539 = vshrl.u32 %v538, 7
        %v540 = vsub.s32 0, %v539
        %v541 = vrot.slane %v534, %v540
        %v542 = vlaneseq
        %v543 = vshrl.u32 %v542, 7
        %v544 = vsub.s32 1, %v543
        %v545 = vrot.slane %v534, %v544
        %549 = vset.pattern.permute.xlu0 0
        %550 = vperm.xlu0 %549, %v536
        %v551 = vpop.permute.xlu0 %550
        %v553 = vmul.f32 %v541, %v551
        %v554 = vmul.f32 %v545, %v551
        %v555 = vmul.f32 %v532, %v553
        %v556 = vmul.f32 %v531, %v554
        %v557 = vadd.f32 %v524, %v555
        %v558 = vadd.f32 %v525, %v556
        %559 = vrot.lane.b32.xlu0 %v348, 17
        %v560 = vpop.permute.xlu0 %559
        %561 = vrot.lane.b32.xlu0 %v349, 17
        %v562 = vpop.permute.xlu0 %561
        %vm563 = vcmp.lt.s32.totalorder %v366, 17
        %v564 = vsel %vm563, %v560, %v562
        %v565 = vsel %vm563, %v562, %v560
        %s566 = scalar_lea.vmem %s5, 12
        %v567 = vld [vmem:[%s566] sm:$0x3]
        %s568 = scalar_lea.vmem %s3, 24
        %v569 = vld [vmem:[%s568] sm:$0xf]
        %v571 = vlaneseq
        %v572 = vshrl.u32 %v571, 7
        %v573 = vsub.s32 0, %v572
        %v574 = vrot.slane %v567, %v573
        %v575 = vlaneseq
        %v576 = vshrl.u32 %v575, 7
        %v577 = vsub.s32 1, %v576
        %v578 = vrot.slane %v567, %v577
        %582 = vset.pattern.permute.xlu0 0
        %583 = vperm.xlu0 %582, %v569
        %v584 = vpop.permute.xlu0 %583
        %v586 = vmul.f32 %v574, %v584
        %v587 = vmul.f32 %v578, %v584
        %v588 = vmul.f32 %v565, %v586
        %v589 = vmul.f32 %v564, %v587
        %v590 = vadd.f32 %v557, %v588
        %v591 = vadd.f32 %v558, %v589
        %592 = vrot.lane.b32.xlu0 %v348, 16
        %v593 = vpop.permute.xlu0 %592
        %594 = vrot.lane.b32.xlu0 %v349, 16
        %v595 = vpop.permute.xlu0 %594
        %vm596 = vcmp.lt.s32.totalorder %v366, 16
        %v597 = vsel %vm596, %v593, %v595
        %v598 = vsel %vm596, %v595, %v593
        %s599 = scalar_lea.vmem %s5, 14
        %v600 = vld [vmem:[%s599] sm:$0x3]
        %s601 = scalar_lea.vmem %s3, 28
        %v602 = vld [vmem:[%s601] sm:$0xf]
        %v604 = vlaneseq
        %v605 = vshrl.u32 %v604, 7
        %v606 = vsub.s32 0, %v605
        %v607 = vrot.slane %v600, %v606
        %v608 = vlaneseq
        %v609 = vshrl.u32 %v608, 7
        %v610 = vsub.s32 1, %v609
        %v611 = vrot.slane %v600, %v610
        %615 = vset.pattern.permute.xlu0 0
        %616 = vperm.xlu0 %615, %v602
        %v617 = vpop.permute.xlu0 %616
        %v619 = vmul.f32 %v607, %v617
        %v620 = vmul.f32 %v611, %v617
        %v621 = vmul.f32 %v598, %v619
        %v622 = vmul.f32 %v597, %v620
        %v623 = vadd.f32 %v590, %v621
        %v624 = vadd.f32 %v591, %v622
        %625 = vrot.lane.b32.xlu0 %v348, 15
        %v626 = vpop.permute.xlu0 %625
        %627 = vrot.lane.b32.xlu0 %v349, 15
        %v628 = vpop.permute.xlu0 %627
        %vm629 = vcmp.lt.s32.totalorder %v366, 15
        %v630 = vsel %vm629, %v626, %v628
        %v631 = vsel %vm629, %v628, %v626
        %s632 = scalar_lea.vmem %s5, 16
        %v633 = vld [vmem:[%s632] sm:$0x3]
        %s634 = scalar_lea.vmem %s3, 32
        %v635 = vld [vmem:[%s634] sm:$0xf]
        %v637 = vlaneseq
        %v638 = vshrl.u32 %v637, 7
        %v639 = vsub.s32 0, %v638
        %v640 = vrot.slane %v633, %v639
        %v641 = vlaneseq
        %v642 = vshrl.u32 %v641, 7
        %v643 = vsub.s32 1, %v642
        %v644 = vrot.slane %v633, %v643
        %648 = vset.pattern.permute.xlu0 0
        %649 = vperm.xlu0 %648, %v635
        %v650 = vpop.permute.xlu0 %649
        %v652 = vmul.f32 %v640, %v650
        %v653 = vmul.f32 %v644, %v650
        %v654 = vmul.f32 %v631, %v652
        %v655 = vmul.f32 %v630, %v653
        %v656 = vadd.f32 %v623, %v654
        %v657 = vadd.f32 %v624, %v655
        %658 = vrot.lane.b32.xlu0 %v348, 14
        %v659 = vpop.permute.xlu0 %658
        %660 = vrot.lane.b32.xlu0 %v349, 14
        %v661 = vpop.permute.xlu0 %660
        %vm662 = vcmp.lt.s32.totalorder %v366, 14
        %v663 = vsel %vm662, %v659, %v661
        %v664 = vsel %vm662, %v661, %v659
        %s665 = scalar_lea.vmem %s5, 18
        %v666 = vld [vmem:[%s665] sm:$0x3]
        %s667 = scalar_lea.vmem %s3, 36
        %v668 = vld [vmem:[%s667] sm:$0xf]
        %v670 = vlaneseq
        %v671 = vshrl.u32 %v670, 7
        %v672 = vsub.s32 0, %v671
        %v673 = vrot.slane %v666, %v672
        %v674 = vlaneseq
        %v675 = vshrl.u32 %v674, 7
        %v676 = vsub.s32 1, %v675
        %v677 = vrot.slane %v666, %v676
        %681 = vset.pattern.permute.xlu0 0
        %682 = vperm.xlu0 %681, %v668
        %v683 = vpop.permute.xlu0 %682
        %v685 = vmul.f32 %v673, %v683
        %v686 = vmul.f32 %v677, %v683
        %v687 = vmul.f32 %v664, %v685
        %v688 = vmul.f32 %v663, %v686
        %v689 = vadd.f32 %v656, %v687
        %v690 = vadd.f32 %v657, %v688
        %691 = vrot.lane.b32.xlu0 %v348, 2
        %v692 = vpop.permute.xlu0 %691
        %693 = vrot.lane.b32.xlu0 %v349, 2
        %v694 = vpop.permute.xlu0 %693
        %vm695 = vcmp.lt.s32.totalorder %v366, 2
        %v696 = vsel %vm695, %v692, %v694
        %v697 = vsel %vm695, %v694, %v692
        %s698 = scalar_lea.vmem %s5, 20
        %v699 = vld [vmem:[%s698] sm:$0x3]
        %s700 = scalar_lea.vmem %s3, 40
        %v701 = vld [vmem:[%s700] sm:$0xf]
        %v703 = vlaneseq
        %v704 = vshrl.u32 %v703, 7
        %v705 = vsub.s32 0, %v704
        %v706 = vrot.slane %v699, %v705
        %v707 = vlaneseq
        %v708 = vshrl.u32 %v707, 7
        %v709 = vsub.s32 1, %v708
        %v710 = vrot.slane %v699, %v709
        %714 = vset.pattern.permute.xlu0 0
        %715 = vperm.xlu0 %714, %v701
        %v716 = vpop.permute.xlu0 %715
        %v718 = vmul.f32 %v706, %v716
        %v719 = vmul.f32 %v710, %v716
        %v720 = vmul.f32 %v697, %v718
        %v721 = vmul.f32 %v696, %v719
        %v722 = vadd.f32 %v689, %v720
        %v723 = vadd.f32 %v690, %v721
        %724 = vrot.lane.b32.xlu0 %v348, 1
        %v725 = vpop.permute.xlu0 %724
        %726 = vrot.lane.b32.xlu0 %v349, 1
        %v727 = vpop.permute.xlu0 %726
        %vm728 = vcmp.lt.s32.totalorder %v366, 1
        %v729 = vsel %vm728, %v725, %v727
        %v730 = vsel %vm728, %v727, %v725
        %s731 = scalar_lea.vmem %s5, 22
        %v732 = vld [vmem:[%s731] sm:$0x3]
        %s733 = scalar_lea.vmem %s3, 44
        %v734 = vld [vmem:[%s733] sm:$0xf]
        %v736 = vlaneseq
        %v737 = vshrl.u32 %v736, 7
        %v738 = vsub.s32 0, %v737
        %v739 = vrot.slane %v732, %v738
        %v740 = vlaneseq
        %v741 = vshrl.u32 %v740, 7
        %v742 = vsub.s32 1, %v741
        %v743 = vrot.slane %v732, %v742
        %747 = vset.pattern.permute.xlu0 0
        %748 = vperm.xlu0 %747, %v734
        %v749 = vpop.permute.xlu0 %748
        %v751 = vmul.f32 %v739, %v749
        %v752 = vmul.f32 %v743, %v749
        %v753 = vmul.f32 %v730, %v751
        %v754 = vmul.f32 %v729, %v752
        %v755 = vadd.f32 %v722, %v753
        %v756 = vadd.f32 %v723, %v754
        %757 = vrot.lane.b32.xlu0 %v348, 127
        %v758 = vpop.permute.xlu0 %757
        %759 = vrot.lane.b32.xlu0 %v349, 127
        %v760 = vpop.permute.xlu0 %759
        %vm761 = vcmp.lt.s32.totalorder %v366, 127
        %v762 = vsel %vm761, %v758, %v760
        %v763 = vsel %vm761, %v760, %v758
        %s764 = scalar_lea.vmem %s5, 26
        %v765 = vld [vmem:[%s764] sm:$0x3]
        %s766 = scalar_lea.vmem %s3, 52
        %v767 = vld [vmem:[%s766] sm:$0xf]
        %v769 = vlaneseq
        %v770 = vshrl.u32 %v769, 7
        %v771 = vsub.s32 0, %v770
        %v772 = vrot.slane %v765, %v771
        %v773 = vlaneseq
        %v774 = vshrl.u32 %v773, 7
        %v775 = vsub.s32 1, %v774
        %v776 = vrot.slane %v765, %v775
        %780 = vset.pattern.permute.xlu0 0
        %781 = vperm.xlu0 %780, %v767
        %v782 = vpop.permute.xlu0 %781
        %v784 = vmul.f32 %v772, %v782
        %v785 = vmul.f32 %v776, %v782
        %v786 = vmul.f32 %v762, %v784
        %v787 = vmul.f32 %v763, %v785
        %v788 = vadd.f32 %v755, %v786
        %v789 = vadd.f32 %v756, %v787
        %790 = vrot.lane.b32.xlu0 %v348, 126
        %v791 = vpop.permute.xlu0 %790
        %792 = vrot.lane.b32.xlu0 %v349, 126
        %v793 = vpop.permute.xlu0 %792
        %vm794 = vcmp.lt.s32.totalorder %v366, 126
        %v795 = vsel %vm794, %v791, %v793
        %v796 = vsel %vm794, %v793, %v791
        %s797 = scalar_lea.vmem %s5, 28
        %v798 = vld [vmem:[%s797] sm:$0x3]
        %s799 = scalar_lea.vmem %s3, 56
        %v800 = vld [vmem:[%s799] sm:$0xf]
        %v802 = vlaneseq
        %v803 = vshrl.u32 %v802, 7
        %v804 = vsub.s32 0, %v803
        %v805 = vrot.slane %v798, %v804
        %v806 = vlaneseq
        %v807 = vshrl.u32 %v806, 7
        %v808 = vsub.s32 1, %v807
        %v809 = vrot.slane %v798, %v808
        %813 = vset.pattern.permute.xlu0 0
        %814 = vperm.xlu0 %813, %v800
        %v815 = vpop.permute.xlu0 %814
        %v817 = vmul.f32 %v805, %v815
        %v818 = vmul.f32 %v809, %v815
        %v819 = vmul.f32 %v795, %v817
        %v820 = vmul.f32 %v796, %v818
        %v821 = vadd.f32 %v788, %v819
        %v822 = vadd.f32 %v789, %v820
        %823 = vrot.lane.b32.xlu0 %v348, 114
        %v824 = vpop.permute.xlu0 %823
        %825 = vrot.lane.b32.xlu0 %v349, 114
        %v826 = vpop.permute.xlu0 %825
        %vm827 = vcmp.lt.s32.totalorder %v366, 114
        %v828 = vsel %vm827, %v824, %v826
        %v829 = vsel %vm827, %v826, %v824
        %s830 = scalar_lea.vmem %s5, 30
        %v831 = vld [vmem:[%s830] sm:$0x3]
        %s832 = scalar_lea.vmem %s3, 60
        %v833 = vld [vmem:[%s832] sm:$0xf]
        %v835 = vlaneseq
        %v836 = vshrl.u32 %v835, 7
        %v837 = vsub.s32 0, %v836
        %v838 = vrot.slane %v831, %v837
        %v839 = vlaneseq
        %v840 = vshrl.u32 %v839, 7
        %v841 = vsub.s32 1, %v840
        %v842 = vrot.slane %v831, %v841
        %846 = vset.pattern.permute.xlu0 0
        %847 = vperm.xlu0 %846, %v833
        %v848 = vpop.permute.xlu0 %847
        %v850 = vmul.f32 %v838, %v848
        %v851 = vmul.f32 %v842, %v848
        %v852 = vmul.f32 %v828, %v850
        %v853 = vmul.f32 %v829, %v851
        %v854 = vadd.f32 %v821, %v852
        %v855 = vadd.f32 %v822, %v853
        %856 = vrot.lane.b32.xlu0 %v348, 113
        %v857 = vpop.permute.xlu0 %856
        %858 = vrot.lane.b32.xlu0 %v349, 113
        %v859 = vpop.permute.xlu0 %858
        %vm860 = vcmp.lt.s32.totalorder %v366, 113
        %v861 = vsel %vm860, %v857, %v859
        %v862 = vsel %vm860, %v859, %v857
        %s863 = scalar_lea.vmem %s5, 32
        %v864 = vld [vmem:[%s863] sm:$0x3]
        %s865 = scalar_lea.vmem %s3, 64
        %v866 = vld [vmem:[%s865] sm:$0xf]
        %v868 = vlaneseq
        %v869 = vshrl.u32 %v868, 7
        %v870 = vsub.s32 0, %v869
        %v871 = vrot.slane %v864, %v870
        %v872 = vlaneseq
        %v873 = vshrl.u32 %v872, 7
        %v874 = vsub.s32 1, %v873
        %v875 = vrot.slane %v864, %v874
        %879 = vset.pattern.permute.xlu0 0
        %880 = vperm.xlu0 %879, %v866
        %v881 = vpop.permute.xlu0 %880
        %v883 = vmul.f32 %v871, %v881
        %v884 = vmul.f32 %v875, %v881
        %v885 = vmul.f32 %v861, %v883
        %v886 = vmul.f32 %v862, %v884
        %v887 = vadd.f32 %v854, %v885
        %v888 = vadd.f32 %v855, %v886
        %889 = vrot.lane.b32.xlu0 %v348, 112
        %v890 = vpop.permute.xlu0 %889
        %891 = vrot.lane.b32.xlu0 %v349, 112
        %v892 = vpop.permute.xlu0 %891
        %vm893 = vcmp.lt.s32.totalorder %v366, 112
        %v894 = vsel %vm893, %v890, %v892
        %v895 = vsel %vm893, %v892, %v890
        %s896 = scalar_lea.vmem %s5, 34
        %v897 = vld [vmem:[%s896] sm:$0x3]
        %s898 = scalar_lea.vmem %s3, 68
        %v899 = vld [vmem:[%s898] sm:$0xf]
        %v901 = vlaneseq
        %v902 = vshrl.u32 %v901, 7
        %v903 = vsub.s32 0, %v902
        %v904 = vrot.slane %v897, %v903
        %v905 = vlaneseq
        %v906 = vshrl.u32 %v905, 7
        %v907 = vsub.s32 1, %v906
        %v908 = vrot.slane %v897, %v907
        %912 = vset.pattern.permute.xlu0 0
        %913 = vperm.xlu0 %912, %v899
        %v914 = vpop.permute.xlu0 %913
        %v916 = vmul.f32 %v904, %v914
        %v917 = vmul.f32 %v908, %v914
        %v918 = vmul.f32 %v894, %v916
        %v919 = vmul.f32 %v895, %v917
        %v920 = vadd.f32 %v887, %v918
        %v921 = vadd.f32 %v888, %v919
        %922 = vrot.lane.b32.xlu0 %v348, 111
        %v923 = vpop.permute.xlu0 %922
        %924 = vrot.lane.b32.xlu0 %v349, 111
        %v925 = vpop.permute.xlu0 %924
        %vm926 = vcmp.lt.s32.totalorder %v366, 111
        %v927 = vsel %vm926, %v923, %v925
        %v928 = vsel %vm926, %v925, %v923
        %s929 = scalar_lea.vmem %s5, 36
        %v930 = vld [vmem:[%s929] sm:$0x3]
        %s931 = scalar_lea.vmem %s3, 72
        %v932 = vld [vmem:[%s931] sm:$0xf]
        %v934 = vlaneseq
        %v935 = vshrl.u32 %v934, 7
        %v936 = vsub.s32 0, %v935
        %v937 = vrot.slane %v930, %v936
        %v938 = vlaneseq
        %v939 = vshrl.u32 %v938, 7
        %v940 = vsub.s32 1, %v939
        %v941 = vrot.slane %v930, %v940
        %945 = vset.pattern.permute.xlu0 0
        %946 = vperm.xlu0 %945, %v932
        %v947 = vpop.permute.xlu0 %946
        %v949 = vmul.f32 %v937, %v947
        %v950 = vmul.f32 %v941, %v947
        %v951 = vmul.f32 %v927, %v949
        %v952 = vmul.f32 %v928, %v950
        %v953 = vadd.f32 %v920, %v951
        %v954 = vadd.f32 %v921, %v952
        %955 = vrot.lane.b32.xlu0 %v348, 110
        %v956 = vpop.permute.xlu0 %955
        %957 = vrot.lane.b32.xlu0 %v349, 110
        %v958 = vpop.permute.xlu0 %957
        %vm959 = vcmp.lt.s32.totalorder %v366, 110
        %v960 = vsel %vm959, %v956, %v958
        %v961 = vsel %vm959, %v958, %v956
        %s962 = scalar_lea.vmem %s5, 38
        %v963 = vld [vmem:[%s962] sm:$0x3]
        %s964 = scalar_lea.vmem %s3, 76
        %v965 = vld [vmem:[%s964] sm:$0xf]
        %v967 = vlaneseq
        %v968 = vshrl.u32 %v967, 7
        %v969 = vsub.s32 0, %v968
        %v970 = vrot.slane %v963, %v969
        %v971 = vlaneseq
        %v972 = vshrl.u32 %v971, 7
        %v973 = vsub.s32 1, %v972
        %v974 = vrot.slane %v963, %v973
        %978 = vset.pattern.permute.xlu0 0
        %979 = vperm.xlu0 %978, %v965
        %v980 = vpop.permute.xlu0 %979
        %v982 = vmul.f32 %v970, %v980
        %v983 = vmul.f32 %v974, %v980
        %v984 = vmul.f32 %v960, %v982
        %v985 = vmul.f32 %v961, %v983
        %v986 = vadd.f32 %v953, %v984
        %v987 = vadd.f32 %v954, %v985
        %988 = vrot.lane.b32.xlu0 %v348, 98
        %v989 = vpop.permute.xlu0 %988
        %990 = vrot.lane.b32.xlu0 %v349, 98
        %v991 = vpop.permute.xlu0 %990
        %vm992 = vcmp.lt.s32.totalorder %v366, 98
        %v993 = vsel %vm992, %v989, %v991
        %v994 = vsel %vm992, %v991, %v989
        %s995 = scalar_lea.vmem %s5, 40
        %v996 = vld [vmem:[%s995] sm:$0x3]
        %s997 = scalar_lea.vmem %s3, 80
        %v998 = vld [vmem:[%s997] sm:$0xf]
        %v1000 = vlaneseq
        %v1001 = vshrl.u32 %v1000, 7
        %v1002 = vsub.s32 0, %v1001
        %v1003 = vrot.slane %v996, %v1002
        %v1004 = vlaneseq
        %v1005 = vshrl.u32 %v1004, 7
        %v1006 = vsub.s32 1, %v1005
        %v1007 = vrot.slane %v996, %v1006
        %1011 = vset.pattern.permute.xlu0 0
        %1012 = vperm.xlu0 %1011, %v998
        %v1013 = vpop.permute.xlu0 %1012
        %v1015 = vmul.f32 %v1003, %v1013
        %v1016 = vmul.f32 %v1007, %v1013
        %v1017 = vmul.f32 %v993, %v1015
        %v1018 = vmul.f32 %v994, %v1016
        %v1019 = vadd.f32 %v986, %v1017
        %v1020 = vadd.f32 %v987, %v1018
        %1021 = vrot.lane.b32.xlu0 %v348, 97
        %v1022 = vpop.permute.xlu0 %1021
        %1023 = vrot.lane.b32.xlu0 %v349, 97
        %v1024 = vpop.permute.xlu0 %1023
        %vm1025 = vcmp.lt.s32.totalorder %v366, 97
        %v1026 = vsel %vm1025, %v1022, %v1024
        %v1027 = vsel %vm1025, %v1024, %v1022
        %s1028 = scalar_lea.vmem %s5, 42
        %v1029 = vld [vmem:[%s1028] sm:$0x3]
        %s1030 = scalar_lea.vmem %s3, 84
        %v1031 = vld [vmem:[%s1030] sm:$0xf]
        %v1033 = vlaneseq
        %v1034 = vshrl.u32 %v1033, 7
        %v1035 = vsub.s32 0, %v1034
        %v1036 = vrot.slane %v1029, %v1035
        %v1037 = vlaneseq
        %v1038 = vshrl.u32 %v1037, 7
        %v1039 = vsub.s32 1, %v1038
        %v1040 = vrot.slane %v1029, %v1039
        %1044 = vset.pattern.permute.xlu0 0
        %1045 = vperm.xlu0 %1044, %v1031
        %v1046 = vpop.permute.xlu0 %1045
        %v1048 = vmul.f32 %v1036, %v1046
        %v1049 = vmul.f32 %v1040, %v1046
        %v1050 = vmul.f32 %v1026, %v1048
        %v1051 = vmul.f32 %v1027, %v1049
        %v1052 = vadd.f32 %v1019, %v1050
        %v1053 = vadd.f32 %v1020, %v1051
        %1054 = vrot.lane.b32.xlu0 %v348, 96
        %v1055 = vpop.permute.xlu0 %1054
        %1056 = vrot.lane.b32.xlu0 %v349, 96
        %v1057 = vpop.permute.xlu0 %1056
        %vm1058 = vcmp.lt.s32.totalorder %v366, 96
        %v1059 = vsel %vm1058, %v1055, %v1057
        %v1060 = vsel %vm1058, %v1057, %v1055
        %s1061 = scalar_lea.vmem %s5, 44
        %v1062 = vld [vmem:[%s1061] sm:$0x3]
        %s1063 = scalar_lea.vmem %s3, 88
        %v1064 = vld [vmem:[%s1063] sm:$0xf]
        %v1066 = vlaneseq
        %v1067 = vshrl.u32 %v1066, 7
        %v1068 = vsub.s32 0, %v1067
        %v1069 = vrot.slane %v1062, %v1068
        %v1070 = vlaneseq
        %v1071 = vshrl.u32 %v1070, 7
        %v1072 = vsub.s32 1, %v1071
        %v1073 = vrot.slane %v1062, %v1072
        %1077 = vset.pattern.permute.xlu0 0
        %1078 = vperm.xlu0 %1077, %v1064
        %v1079 = vpop.permute.xlu0 %1078
        %v1081 = vmul.f32 %v1069, %v1079
        %v1082 = vmul.f32 %v1073, %v1079
        %v1083 = vmul.f32 %v1059, %v1081
        %v1084 = vmul.f32 %v1060, %v1082
        %v1085 = vadd.f32 %v1052, %v1083
        %v1086 = vadd.f32 %v1053, %v1084
        %1087 = vrot.lane.b32.xlu0 %v348, 95
        %v1088 = vpop.permute.xlu0 %1087
        %1089 = vrot.lane.b32.xlu0 %v349, 95
        %v1090 = vpop.permute.xlu0 %1089
        %vm1091 = vcmp.lt.s32.totalorder %v366, 95
        %v1092 = vsel %vm1091, %v1088, %v1090
        %v1093 = vsel %vm1091, %v1090, %v1088
        %s1094 = scalar_lea.vmem %s5, 46
        %v1095 = vld [vmem:[%s1094] sm:$0x3]
        %s1096 = scalar_lea.vmem %s3, 92
        %v1097 = vld [vmem:[%s1096] sm:$0xf]
        %v1099 = vlaneseq
        %v1100 = vshrl.u32 %v1099, 7
        %v1101 = vsub.s32 0, %v1100
        %v1102 = vrot.slane %v1095, %v1101
        %v1103 = vlaneseq
        %v1104 = vshrl.u32 %v1103, 7
        %v1105 = vsub.s32 1, %v1104
        %v1106 = vrot.slane %v1095, %v1105
        %1110 = vset.pattern.permute.xlu0 0
        %1111 = vperm.xlu0 %1110, %v1097
        %v1112 = vpop.permute.xlu0 %1111
        %v1114 = vmul.f32 %v1102, %v1112
        %v1115 = vmul.f32 %v1106, %v1112
        %v1116 = vmul.f32 %v1092, %v1114
        %v1117 = vmul.f32 %v1093, %v1115
        %v1118 = vadd.f32 %v1085, %v1116
        %v1119 = vadd.f32 %v1086, %v1117
        %1120 = vrot.lane.b32.xlu0 %v348, 94
        %v1121 = vpop.permute.xlu0 %1120
        %1122 = vrot.lane.b32.xlu0 %v349, 94
        %v1123 = vpop.permute.xlu0 %1122
        %vm1124 = vcmp.lt.s32.totalorder %v366, 94
        %v1125 = vsel %vm1124, %v1121, %v1123
        %v1126 = vsel %vm1124, %v1123, %v1121
        %s1127 = scalar_lea.vmem %s5, 48
        %v1128 = vld [vmem:[%s1127] sm:$0x3]
        %s1129 = scalar_lea.vmem %s3, 96
        %v1130 = vld [vmem:[%s1129] sm:$0xf]
        %v1132 = vlaneseq
        %v1133 = vshrl.u32 %v1132, 7
        %v1134 = vsub.s32 0, %v1133
        %v1135 = vrot.slane %v1128, %v1134
        %v1136 = vlaneseq
        %v1137 = vshrl.u32 %v1136, 7
        %v1138 = vsub.s32 1, %v1137
        %v1139 = vrot.slane %v1128, %v1138
        %1143 = vset.pattern.permute.xlu0 0
        %1144 = vperm.xlu0 %1143, %v1130
        %v1145 = vpop.permute.xlu0 %1144
        %v1147 = vmul.f32 %v1135, %v1145
        %v1148 = vmul.f32 %v1139, %v1145
        %v1149 = vmul.f32 %v1125, %v1147
        %v1150 = vmul.f32 %v1126, %v1148
        %v1151 = vadd.f32 %v1118, %v1149
        %v1152 = vadd.f32 %v1119, %v1150
        %v1153 = vld [vmem:[%s4] sm:$0xf]
        %1155 = vset.pattern.permute.xlu0 0
        %1156 = vperm.xlu0 %1155, %v1153
        %v1157 = vpop.permute.xlu0 %1156
        %v1159 = vadd.f32 %v1151, %v1157
        %v1160 = vadd.f32 %v1152, %v1157
        %v1161 = vadd.f32 %v1159, 3.0
        %v1162 = vadd.f32 %v1160, 3.0
        %v1163 = vmax.f32 %v1161, 0.0
        %v1164 = vmax.f32 %v1162, 0.0
        %v1165 = vmin.f32 %v1163, 6.0
        %v1166 = vmin.f32 %v1164, 6.0
        %v1167 = vmul.f32 %v1159, %v1165
        %v1168 = vmul.f32 %v1160, %v1166
        %v1169 = vmul.f32 %v1167, 0.16666667
        %v1170 = vmul.f32 %v1168, 0.16666667
        %v1173 = vrot.slane %v1169, 4
        %v1174 = vrot.slane %v1170, 4
        %1177 = vst [vmem:[%s244] sm:$0xf0] %v1173
        %1178 = vst [vmem:[%s244 + $0x8] sm:$0xf0] %v1174
        %s1179 = sand.u32 %s159, 1
        %s1180 = scalar_lea.sflag [#allocation3], %s1179
        %s1181 = sand.u32 %s159, 1
        %s1182 = smul.addr %s1181, 16
        %s1183 = scalar_lea.vmem [#allocation2], %s1182
        // Predicated region
        $region45: #{tpu_custom_call.1} parent=43 // pred_check
          %p1184 = pneg %p169
        $region46: #{tpu_custom_call.1} parent=43 // pred_check_branch
          %1186 = sbr.rel (%p1184) target = $region48
        $region47: #{tpu_custom_call.1} parent=43 // pred_region
          %s1188 = ssub.s32 256, 256
          %1189 = vsyncadd %s1180, %s1188
          %s1190 = smul.addr %s20, 2
          %s1191 = smul.addr %s1190, 128
          %s1192 = scalar_lea.hbm %s6, %s1191
          %s1194 = sshll.u32 %s1183, 4
          %s1195 = int_to_ptr.vmem [resolvable:$true] %s1194
          %1197 = dma.vmem_to_hbm [thread:$0]  %s1195, 256, %s1192, %s1180
        $region48: #{tpu_custom_call.1} parent=43 // pred_fallthru
          _
      $region44: #{tpu_custom_call.1} parent=5 // pred_fallthru
        _
      %p1198 = scmp.le.s32.totalorder 2, %s15
      // Predicated region
      $region49: #{tpu_custom_call.1} parent=5 // pred_check
        %p1199 = pneg %p1198
      $region50: #{tpu_custom_call.1} parent=5 // pred_check_branch
        %1201 = sbr.rel (%p1199) target = $region52
      $region51: #{tpu_custom_call.1} parent=5 // pred_region
        %s1202 = ssub.s32 %s15, 2
        // Predicated region
        $region53: #{tpu_custom_call.1} parent=51 // pred_check
          %p1203 = pneg %p175
        $region54: #{tpu_custom_call.1} parent=51 // pred_check_branch
          %1205 = sbr.rel (%p1203) target = $region56
        $region55: #{tpu_custom_call.1} parent=51 // pred_region
          %s1206 = sand.u32 %s160, 1
          %s1207 = scalar_lea.sflag [#allocation3], %s1206
          %s1208 = sand.u32 %s160, 1
          %s1209 = smul.addr %s1208, 16
          %s1210 = scalar_lea.vmem [#allocation2], %s1209
          %1211 = dma.done %s1207, 256
        $region56: #{tpu_custom_call.1} parent=51 // pred_fallthru
          _
      $region52: #{tpu_custom_call.1} parent=5 // pred_fallthru
        _
    $region6: #{tpu_custom_call.1} parent=1 // loop_footer
      %s19 = sadd.s32 1, %s15
    $region7: #{tpu_custom_call.1} parent=1 // loop_footer_branch
      %14 = sbr.rel target = $region3
    $region8: #{tpu_custom_call.1} parent=1 // loop_exit
      _
    %1212 = vsyncpa [#allocation3], 1
    %s1213 = scalar_lea.sflag [#allocation3], 1
    %1214 = vsyncpa %s1213, 1

</llo_original>
